<compile_context>
chip_gen: v7x
topology: tpu7x:2x2x1
jax: 0.10.0
libtpu: 0.0.40
codegen_flags: <defaults>
</compile_context>

<pallas_src>
import math
import functools

import jax
import jax.numpy as jnp
from jax import lax
from jax.experimental import pallas as pl
from jax.experimental.pallas import tpu as pltpu

COMPUTE_DTYPE = jnp.bfloat16      # MXU operand / inter-stage activation dtype
VMEM_LIMIT = 48 * 1024 * 1024     # safe on v7x (64 MiB phys), generous on v5e/v6e

# Linear tile defaults (clamped to the problem size).
LIN_TM, LIN_TN, LIN_TK = 256, 1024, 1024
# Attention tile defaults.
Q_TILE, KV_TILE = 256, 512


def _round_up(x, m):
    return ((x + m - 1) // m) * m


# ----------------------------------------------------------------------------
# Tiled linear:  y[p] = x @ w_all[w_base + p] + b_all[w_base + p]
# (activation stream shared across the projection axis p)
# ----------------------------------------------------------------------------
def _linear_kernel(x_ref, w_ref, b_ref, o_ref, acc_ref):
    k = pl.program_id(3)

    @pl.when(k == 0)
    def _():
        acc_ref[...] = jnp.zeros_like(acc_ref)

    x = x_ref[...].astype(COMPUTE_DTYPE)          # (tm, tk)
    w = w_ref[0].astype(COMPUTE_DTYPE)            # (tk, tn) -- already bf16
    acc_ref[...] += jnp.dot(x, w, preferred_element_type=jnp.float32)

    @pl.when(k == pl.num_programs(3) - 1)
    def _():
        o_ref[0] = (acc_ref[...] + b_ref[0]).astype(o_ref.dtype)


def _project(x, w_all, b_all, *, n_proj, w_base, out_dtype,
             tm=LIN_TM, tn=LIN_TN, tk=LIN_TK):
    """x: (M, K) shared activations; w_all: (P_total, K, N) bf16;
    b_all: (P_total, N) fp32.  Returns (n_proj, M, N) out_dtype."""
    M, K = x.shape
    P_total, _, N = w_all.shape

    tm = min(tm, _round_up(M, 8))
    tn = min(tn, _round_up(N, 128))
    tk = min(tk, _round_up(K, 128))
    Mp, Kp, Np = _round_up(M, tm), _round_up(K, tk), _round_up(N, tn)

    if (Mp, Kp) != (M, K):
        x = jnp.pad(x, ((0, Mp - M), (0, Kp - K)))
    if (Kp, Np) != (K, N):
        w_all = jnp.pad(w_all, ((0, 0), (0, Kp - K), (0, Np - N)))
    if Np != N:
        b_all = jnp.pad(b_all, ((0, 0), (0, Np - N)))
    b3 = b_all.reshape(P_total, 1, Np)

    grid = (n_proj, Mp // tm, Np // tn, Kp // tk)
    out = pl.pallas_call(
        _linear_kernel,
        out_shape=jax.ShapeDtypeStruct((n_proj, Mp, Np), out_dtype),
        grid_spec=pltpu.PrefetchScalarGridSpec(
            num_scalar_prefetch=0,
            grid=grid,
            in_specs=[
                # activation stream shared across p (no stacked HBM copy)
                pl.BlockSpec((tm, tk), lambda p, i, j, k: (i, k)),
                pl.BlockSpec((1, tk, tn), lambda p, i, j, k: (w_base + p, k, j)),
                pl.BlockSpec((1, 1, tn), lambda p, i, j, k: (w_base + p, 0, j)),
            ],
            out_specs=pl.BlockSpec((1, tm, tn), lambda p, i, j, k: (p, i, j)),
            scratch_shapes=[pltpu.VMEM((tm, tn), jnp.float32)],
        ),
        compiler_params=pltpu.CompilerParams(
            dimension_semantics=("parallel", "parallel", "parallel", "arbitrary"),
            vmem_limit_bytes=VMEM_LIMIT,
        ),
    )(x, w_all, b3)
    return out[:, :M, :N]


# ----------------------------------------------------------------------------
# Flash-style attention: grid = (B, q-tiles, kv-tiles), online softmax,
# per-head running stats + lane-dense context accumulator in VMEM scratch.
# ----------------------------------------------------------------------------
def _flash_attn_kernel(q_ref, k_ref, v_ref, o_ref, m_scr, l_scr, acc_scr, *,
                       head_count, dim_per_head, kv_len, kv_tile, mask_keys):
    kv = pl.program_id(2)

    @pl.when(kv == 0)
    def _():
        m_scr[...] = jnp.full_like(m_scr, -jnp.inf)
        l_scr[...] = jnp.zeros_like(l_scr)
        acc_scr[...] = jnp.zeros_like(acc_scr)

    if mask_keys:   # static flag: only emitted when Sk needed padding
        key_pos = kv * kv_tile + lax.broadcasted_iota(jnp.int32, (1, kv_tile), 1)
        invalid = key_pos >= kv_len

    # Static unroll over heads (small H); per-head operands are sliced from
    # the refs so only one head's tiles are live at a time.
    # TODO(synk): process adjacent head pairs per P.V matmul to present
    #             128-wide MXU operands when dim_per_head == 64.
    for h in range(head_count):
        lo, hi = h * dim_per_head, (h + 1) * dim_per_head
        qh = q_ref[0, 0, :, lo:hi]                       # (tq, dh) bf16
        kh = k_ref[0, 0, :, lo:hi]                       # (tkv, dh) bf16

        # scores = qh @ kh^T (contraction on dh), fp32 accumulation.
        s = lax.dot_general(qh, kh, (((1,), (1,)), ((), ())),
                            preferred_element_type=jnp.float32)   # (tq, tkv)
        if mask_keys:
            s = jnp.where(invalid, -1e30, s)

        # Online softmax update (fp32).
        # TODO(synk): bf16 exp would ~double EUP throughput on v6e/v7x if the
        #             accuracy budget allows.
        m_prev = m_scr[:, h:h + 1]                                 # (tq, 1)
        m_new = jnp.maximum(m_prev, jnp.max(s, axis=-1, keepdims=True))
        alpha = jnp.exp(m_prev - m_new)
        p = jnp.exp(s - m_new)                                     # (tq, tkv)
        l_scr[:, h:h + 1] = alpha * l_scr[:, h:h + 1] + jnp.sum(
            p, axis=-1, keepdims=True)
        m_scr[:, h:h + 1] = m_new

        vh = v_ref[0, 0, :, lo:hi]                       # (tkv, dh) bf16
        pv = jnp.dot(p.astype(COMPUTE_DTYPE), vh,
                     preferred_element_type=jnp.float32)           # (tq, dh)
        acc_scr[:, lo:hi] = alpha * acc_scr[:, lo:hi] + pv

    @pl.when(kv == pl.num_programs(2) - 1)
    def _():
        for h in range(head_count):
            lo, hi = h * dim_per_head, (h + 1) * dim_per_head
            inv = pl.reciprocal(l_scr[:, h:h + 1])       # exact (approx=False)
            acc_scr[:, lo:hi] = acc_scr[:, lo:hi] * inv
        # single lane-dense (tq, D) store of the merged-head context
        o_ref[0] = acc_scr[...].astype(o_ref.dtype)


def _flash_attention(q4, k4, v4, *, q_idx, k_idx, v_idx, head_count,
                     out_dtype=COMPUTE_DTYPE, tq=Q_TILE, tkv=KV_TILE):
    """q4/k4/v4: (G, B, S, D) projected activations (may be the same array);
    q_idx/k_idx/v_idx pick the leading index.  Returns (B, Sq, D) context."""
    _, B, Sq, D = q4.shape
    Sk = k4.shape[2]
    dh = D // head_count

    tq = min(tq, _round_up(Sq, 8))
    tkv = min(tkv, _round_up(Sk, 8))
    Sq_p, Sk_p = _round_up(Sq, tq), _round_up(Sk, tkv)

    if Sq_p != Sq:
        q4 = jnp.pad(q4, ((0, 0), (0, 0), (0, Sq_p - Sq), (0, 0)))
    if Sk_p != Sk:
        k4 = jnp.pad(k4, ((0, 0), (0, 0), (0, Sk_p - Sk), (0, 0)))
        v4 = jnp.pad(v4, ((0, 0), (0, 0), (0, Sk_p - Sk), (0, 0)))

    kernel = functools.partial(
        _flash_attn_kernel, head_count=head_count, dim_per_head=dh,
        kv_len=Sk, kv_tile=tkv, mask_keys=(Sk_p != Sk))

    out = pl.pallas_call(
        kernel,
        out_shape=jax.ShapeDtypeStruct((B, Sq_p, D), out_dtype),
        grid_spec=pltpu.PrefetchScalarGridSpec(
            num_scalar_prefetch=0,
            grid=(B, Sq_p // tq, Sk_p // tkv),
            in_specs=[
                pl.BlockSpec((1, 1, tq, D), lambda b, qi, ki: (q_idx, b, qi, 0)),
                pl.BlockSpec((1, 1, tkv, D), lambda b, qi, ki: (k_idx, b, ki, 0)),
                pl.BlockSpec((1, 1, tkv, D), lambda b, qi, ki: (v_idx, b, ki, 0)),
            ],
            out_specs=pl.BlockSpec((1, tq, D), lambda b, qi, ki: (b, qi, 0)),
            scratch_shapes=[
                pltpu.VMEM((tq, head_count), jnp.float32),   # running max
                pltpu.VMEM((tq, head_count), jnp.float32),   # running sum
                pltpu.VMEM((tq, D), jnp.float32),            # context accumulator
            ],
        ),
        compiler_params=pltpu.CompilerParams(
            dimension_semantics=("parallel", "parallel", "arbitrary"),
            vmem_limit_bytes=VMEM_LIMIT,
        ),
    )(q4, k4, v4)
    return out[:, :Sq, :] if Sq_p != Sq else out


# ----------------------------------------------------------------------------
# Forward wrapper (mask=None, layer_cache=None path of the PyTorch module)
# ----------------------------------------------------------------------------
def multi_headed_attention(key, value, query, params, head_count,
                           *, self_attention=False):
    """Matches MultiHeadedAttention.forward with mask=None, layer_cache=None,
    predefined_graph_1=None, use_final_linear=True; dropout = eval identity.

    Set self_attention=True (static) when key/value/query are the same tensor:
    the K/V/Q projections then share a single activation stream (one fused
    pallas_call over the projection axis, no stacked HBM copy)."""
    B, Sk, D = key.shape
    Sq = query.shape[1]
    assert D % head_count == 0

    if self_attention:
        x2d = query.reshape(B * Sq, D)
        proj = _project(x2d, params["w_kvq"], params["b_kvq"],
                        n_proj=3, w_base=0, out_dtype=COMPUTE_DTYPE)
        qkv = proj.reshape(3, B, Sq, D)          # [0]=K, [1]=V, [2]=Q
        ctx = _flash_attention(qkv, qkv, qkv, q_idx=2, k_idx=0, v_idx=1,
                               head_count=head_count)
    else:
        kp = _project(key.reshape(B * Sk, D), params["w_kvq"], params["b_kvq"],
                      n_proj=1, w_base=0, out_dtype=COMPUTE_DTYPE
                      ).reshape(1, B, Sk, D)
        vp = _project(value.reshape(B * Sk, D), params["w_kvq"], params["b_kvq"],
                      n_proj=1, w_base=1, out_dtype=COMPUTE_DTYPE
                      ).reshape(1, B, Sk, D)
        qp = _project(query.reshape(B * Sq, D), params["w_kvq"], params["b_kvq"],
                      n_proj=1, w_base=2, out_dtype=COMPUTE_DTYPE
                      ).reshape(1, B, Sq, D)
        ctx = _flash_attention(qp, kp, vp, q_idx=0, k_idx=0, v_idx=0,
                               head_count=head_count)

    # Final linear on the already-merged [B*Sq, D] bf16 context.
    out = _project(ctx.reshape(B * Sq, D), params["wo"], params["bo"],
                   n_proj=1, w_base=0, out_dtype=jnp.float32)
    return out[0].reshape(B, Sq, D)


# ----------------------------------------------------------------------------
# Parameters
# ----------------------------------------------------------------------------
def init_params(key, model_dim):
    """Raw fp32 params; weights stored as (D_in, D_out) == PyTorch weight^T."""
    ks = jax.random.split(key, 8)
    s = 1.0 / math.sqrt(model_dim)
    u = lambda k, shape: jax.random.uniform(k, shape, jnp.float32, -s, s)
    return {
        "wk": u(ks[0], (model_dim, model_dim)), "bk": u(ks[1], (model_dim,)),
        "wv": u(ks[2], (model_dim, model_dim)), "bv": u(ks[3], (model_dim,)),
        "wq": u(ks[4], (model_dim, model_dim)), "bq": u(ks[5], (model_dim,)),
        "wo": u(ks[6], (model_dim, model_dim)), "bo": u(ks[7], (model_dim,)),
    }


def prepare_params(raw, head_count):
    """Stack K/V/Q weights, fold the 1/sqrt(dim_per_head) query scale into
    W_q / b_q, and pre-cast weights to bf16 (biases stay fp32)."""
    D = raw["wq"].shape[0]
    scale = 1.0 / math.sqrt(D // head_count)
    return {
        "w_kvq": jnp.stack([raw["wk"], raw["wv"],
                            raw["wq"] * scale]).astype(COMPUTE_DTYPE),
        "b_kvq": jnp.stack([raw["bk"], raw["bv"], raw["bq"] * scale]),
        "wo": raw["wo"].astype(COMPUTE_DTYPE)[None],    # (1, D, D)
        "bo": raw["bo"][None],                          # (1, D)
    }


def _reference(key, value, query, raw, head_count):
    """Pure-JAX fp32 reference mirroring the PyTorch forward (eval mode)."""
    B, Sk, D = key.shape
    Sq = query.shape[1]
    dh = D // head_count
    k = key @ raw["wk"] + raw["bk"]
    v = value @ raw["wv"] + raw["bv"]
    q = query @ raw["wq"] + raw["bq"]
    shp = lambda x, S: x.reshape(B, S, head_count, dh).transpose(0, 2, 1, 3)
    k, v, q = shp(k, Sk), shp(v, Sk), shp(q, Sq) / math.sqrt(dh)
    scores = jnp.einsum("bhqd,bhkd->bhqk", q, k)
    attn = jax.nn.softmax(scores, axis=-1)
    ctx = jnp.einsum("bhqk,bhkd->bhqd", attn, v)
    ctx = ctx.transpose(0, 2, 1, 3).reshape(B, Sq, D)
    return ctx @ raw["wo"] + raw["bo"]


if __name__ == "__main__":
    batch, seq, model_dim, head_count = 2, 8, 32, 4

    root = jax.random.PRNGKey(0)
    k_params, k_key, k_val, k_qry = jax.random.split(root, 4)

    raw = init_params(k_params, model_dim)
    params = prepare_params(raw, head_count)
    key_in = jax.random.normal(k_key, (batch, seq, model_dim), jnp.float32)
    value_in = jax.random.normal(k_val, (batch, seq, model_dim), jnp.float32)
    query_in = jax.random.normal(k_qry, (batch, seq, model_dim), jnp.float32)

    mha = jax.jit(multi_headed_attention,
                  static_argnames=("head_count", "self_attention"))

    # General path: distinct key / value / query.
    out = jax.block_until_ready(
        mha(key_in, value_in, query_in, params, head_count=head_count))
    assert out.shape == (batch, seq, model_dim)
    ref = _reference(key_in, value_in, query_in, raw, head_count)
    assert jnp.allclose(out, ref, atol=5e-2, rtol=5e-2), "cross-attention mismatch"

    # Fused self-attention path (single shared activation stream).
    out_self = jax.block_until_ready(
        mha(query_in, query_in, query_in, params, head_count=head_count,
            self_attention=True))
    ref_self = _reference(query_in, query_in, query_in, raw, head_count)
    assert jnp.allclose(out_self, ref_self, atol=5e-2, rtol=5e-2), \
        "self-attention mismatch"

    print("KERNEL_OK")
</pallas_src>

<mosaic_0001>
module attributes {stable_mosaic.version = 11 : i64} {
  func.func @_linear_kernel(%arg0: i32, %arg1: i32, %arg2: i32, %arg3: i32, %arg4: memref<16x128xf32, #tpu.memory_space<vmem>>, %arg5: memref<1x128x128xbf16, #tpu.memory_space<vmem>>, %arg6: memref<1x1x128xf32, #tpu.memory_space<vmem>>, %arg7: memref<1x16x128xbf16, #tpu.memory_space<vmem>>, %arg8: memref<16x128xf32, #tpu.memory_space<vmem>>) attributes {dimension_semantics = [#tpu.dimension_semantics<parallel>, #tpu.dimension_semantics<parallel>, #tpu.dimension_semantics<parallel>, #tpu.dimension_semantics<arbitrary>], iteration_bounds = array<i64: 1, 1, 1, 1>, scalar_prefetch = 0 : i64, scratch_operands = 1 : i64, tpu.core_type = #tpu.core_type<tc>, window_params = [{transform_indices = @transform_0, window_bounds = array<i64: 16, 128>}, {transform_indices = @transform_1, window_bounds = array<i64: 1, 128, 128>}, {transform_indices = @transform_2, window_bounds = array<i64: 1, 1, 128>}, {transform_indices = @transform_3, window_bounds = array<i64: 1, 16, 128>}]} {
    %c0_i32 = arith.constant 0 : i32
    %0 = arith.cmpi eq, %arg3, %c0_i32 : i32
    %1 = arith.extui %0 : i1 to i32
    %c0_i32_0 = arith.constant 0 : i32
    %2 = arith.cmpi ne, %1, %c0_i32_0 : i32
    scf.if %2 {
      %cst_11 = arith.constant 0.000000e+00 : f32
      %14 = vector.broadcast %cst_11 : f32 to vector<16x128xf32>
      %c0_12 = arith.constant 0 : index
      %c0_13 = arith.constant 0 : index
      %15 = vector.load %arg8[%c0_12, %c0_13] : memref<16x128xf32, #tpu.memory_space<vmem>>, vector<16x128xf32>
      tpu.vector_store %arg8[%c0_12, %c0_13], %14 {strides = array<i32>} : memref<16x128xf32, #tpu.memory_space<vmem>>, vector<16x128xf32>,
    } else {
    }
    %c0 = arith.constant 0 : index
    %c0_1 = arith.constant 0 : index
    %3 = vector.load %arg4[%c0, %c0_1] : memref<16x128xf32, #tpu.memory_space<vmem>>, vector<16x128xf32>
    %4 = arith.truncf %3 : vector<16x128xf32> to vector<16x128xbf16>
    %c0_2 = arith.constant 0 : index
    %c0_3 = arith.constant 0 : index
    %c0_4 = arith.constant 0 : index
    %5 = vector.load %arg5[%c0_2, %c0_3, %c0_4] : memref<1x128x128xbf16, #tpu.memory_space<vmem>>, vector<1x128x128xbf16>
    %6 = vector.shape_cast %5 : vector<1x128x128xbf16> to vector<128x128xbf16>
    %c0_5 = arith.constant 0 : index
    %c0_6 = arith.constant 0 : index
    %7 = vector.load %arg8[%c0_5, %c0_6] : memref<16x128xf32, #tpu.memory_space<vmem>>, vector<16x128xf32>
    %cst = arith.constant dense<0.000000e+00> : vector<16x128xf32>
    %8 = tpu.matmul %4, %6, %cst {dimension_numbers = #tpu.dot_dimension_numbers<[1], [0], [0], [1], [0, 0, 1, 1], [], []>} : vector<16x128xbf16>, vector<128x128xbf16>, vector<16x128xf32> -> vector<16x128xf32>
    %9 = arith.addf %7, %8 : vector<16x128xf32>
    %c0_7 = arith.constant 0 : index
    %c0_8 = arith.constant 0 : index
    %10 = vector.load %arg8[%c0_7, %c0_8] : memref<16x128xf32, #tpu.memory_space<vmem>>, vector<16x128xf32>
    tpu.vector_store %arg8[%c0_7, %c0_8], %9 {strides = array<i32>} : memref<16x128xf32, #tpu.memory_space<vmem>>, vector<16x128xf32>,
    %c0_i32_9 = arith.constant 0 : i32
    %11 = arith.cmpi eq, %arg3, %c0_i32_9 : i32
    %12 = arith.extui %11 : i1 to i32
    %c0_i32_10 = arith.constant 0 : i32
    %13 = arith.cmpi ne, %12, %c0_i32_10 : i32
    scf.if %13 {
      %c0_11 = arith.constant 0 : index
      %c0_12 = arith.constant 0 : index
      %14 = vector.load %arg8[%c0_11, %c0_12] : memref<16x128xf32, #tpu.memory_space<vmem>>, vector<16x128xf32>
      %c0_13 = arith.constant 0 : index
      %c0_14 = arith.constant 0 : index
      %c0_15 = arith.constant 0 : index
      %15 = vector.load %arg6[%c0_13, %c0_14, %c0_15] : memref<1x1x128xf32, #tpu.memory_space<vmem>>, vector<1x1x128xf32>
      %16 = vector.shape_cast %15 : vector<1x1x128xf32> to vector<1x128xf32>
      %17 = vector.broadcast %16 : vector<1x128xf32> to vector<16x128xf32>
      %18 = arith.addf %14, %17 : vector<16x128xf32>
      %19 = arith.truncf %18 : vector<16x128xf32> to vector<16x128xbf16>
      %c0_16 = arith.constant 0 : index
      %c0_17 = arith.constant 0 : index
      %c0_18 = arith.constant 0 : index
      %20 = vector.load %arg7[%c0_16, %c0_17, %c0_18] : memref<1x16x128xbf16, #tpu.memory_space<vmem>>, vector<1x16x128xbf16>
      %21 = vector.shape_cast %20 : vector<1x16x128xbf16> to vector<16x128xbf16>
      %22 = vector.shape_cast %19 : vector<16x128xbf16> to vector<1x16x128xbf16>
      tpu.vector_store %arg7[%c0_16, %c0_17, %c0_18], %22 {strides = array<i32>} : memref<1x16x128xbf16, #tpu.memory_space<vmem>>, vector<1x16x128xbf16>,
    } else {
    }
    return
  }
  func.func @transform_0(%arg0: i32, %arg1: i32, %arg2: i32, %arg3: i32) -> (i32, i32) {
    %c0_i32 = arith.constant 0 : i32
    return %arg1, %arg3 : i32, i32
  }
  func.func @transform_1(%arg0: i32, %arg1: i32, %arg2: i32, %arg3: i32) -> (i32, i32, i32) {
    %c0_i32 = arith.constant 0 : i32
    %0 = arith.addi %c0_i32, %arg0 : i32
    %c0_i32_0 = arith.constant 0 : i32
    return %0, %arg3, %arg2 : i32, i32, i32
  }
  func.func @transform_2(%arg0: i32, %arg1: i32, %arg2: i32, %arg3: i32) -> (i32, i32, i32) {
    %c0_i32 = arith.constant 0 : i32
    %0 = arith.addi %c0_i32, %arg0 : i32
    %c0_i32_0 = arith.constant 0 : i32
    %c0_i32_1 = arith.constant 0 : i32
    return %0, %c0_i32_0, %arg2 : i32, i32, i32
  }
  func.func @transform_3(%arg0: i32, %arg1: i32, %arg2: i32, %arg3: i32) -> (i32, i32, i32) {
    %c0_i32 = arith.constant 0 : i32
    return %arg0, %arg1, %arg2 : i32, i32, i32
  }
}

module attributes {stable_mosaic.version = 11 : i64} {
  func.func @_linear_kernel(%arg0: i32, %arg1: i32, %arg2: i32, %arg3: i32, %arg4: memref<16x128xf32, #tpu.memory_space<vmem>>, %arg5: memref<1x128x128xbf16, #tpu.memory_space<vmem>>, %arg6: memref<1x1x128xf32, #tpu.memory_space<vmem>>, %arg7: memref<1x16x128xbf16, #tpu.memory_space<vmem>>, %arg8: memref<16x128xf32, #tpu.memory_space<vmem>>) attributes {dimension_semantics = [#tpu.dimension_semantics<parallel>, #tpu.dimension_semantics<parallel>, #tpu.dimension_semantics<parallel>, #tpu.dimension_semantics<arbitrary>], iteration_bounds = array<i64: 1, 1, 1, 1>, scalar_prefetch = 0 : i64, scratch_operands = 1 : i64, tpu.core_type = #tpu.core_type<tc>, window_params = [{transform_indices = @transform_0, window_bounds = array<i64: 16, 128>}, {transform_indices = @transform_1, window_bounds = array<i64: 1, 128, 128>}, {transform_indices = @transform_2, window_bounds = array<i64: 1, 1, 128>}, {transform_indices = @transform_3, window_bounds = array<i64: 1, 16, 128>}]} {
    %c0_i32 = arith.constant 0 : i32
    %0 = arith.cmpi eq, %arg3, %c0_i32 : i32
    %1 = arith.extui %0 : i1 to i32
    %c0_i32_0 = arith.constant 0 : i32
    %2 = arith.cmpi ne, %1, %c0_i32_0 : i32
    scf.if %2 {
      %cst_11 = arith.constant 0.000000e+00 : f32
      %14 = vector.broadcast %cst_11 : f32 to vector<16x128xf32>
      %c0_12 = arith.constant 0 : index
      %c0_13 = arith.constant 0 : index
      %15 = vector.load %arg8[%c0_12, %c0_13] : memref<16x128xf32, #tpu.memory_space<vmem>>, vector<16x128xf32>
      tpu.vector_store %arg8[%c0_12, %c0_13], %14 {strides = array<i32>} : memref<16x128xf32, #tpu.memory_space<vmem>>, vector<16x128xf32>,
    } else {
    }
    %c0 = arith.constant 0 : index
    %c0_1 = arith.constant 0 : index
    %3 = vector.load %arg4[%c0, %c0_1] : memref<16x128xf32, #tpu.memory_space<vmem>>, vector<16x128xf32>
    %4 = arith.truncf %3 : vector<16x128xf32> to vector<16x128xbf16>
    %c0_2 = arith.constant 0 : index
    %c0_3 = arith.constant 0 : index
    %c0_4 = arith.constant 0 : index
    %5 = vector.load %arg5[%c0_2, %c0_3, %c0_4] : memref<1x128x128xbf16, #tpu.memory_space<vmem>>, vector<1x128x128xbf16>
    %6 = vector.shape_cast %5 : vector<1x128x128xbf16> to vector<128x128xbf16>
    %c0_5 = arith.constant 0 : index
    %c0_6 = arith.constant 0 : index
    %7 = vector.load %arg8[%c0_5, %c0_6] : memref<16x128xf32, #tpu.memory_space<vmem>>, vector<16x128xf32>
    %cst = arith.constant dense<0.000000e+00> : vector<16x128xf32>
    %8 = tpu.matmul %4, %6, %cst {dimension_numbers = #tpu.dot_dimension_numbers<[1], [0], [0], [1], [0, 0, 1, 1], [], []>} : vector<16x128xbf16>, vector<128x128xbf16>, vector<16x128xf32> -> vector<16x128xf32>
    %9 = arith.addf %7, %8 : vector<16x128xf32>
    %c0_7 = arith.constant 0 : index
    %c0_8 = arith.constant 0 : index
    %10 = vector.load %arg8[%c0_7, %c0_8] : memref<16x128xf32, #tpu.memory_space<vmem>>, vector<16x128xf32>
    tpu.vector_store %arg8[%c0_7, %c0_8], %9 {strides = array<i32>} : memref<16x128xf32, #tpu.memory_space<vmem>>, vector<16x128xf32>,
    %c0_i32_9 = arith.constant 0 : i32
    %11 = arith.cmpi eq, %arg3, %c0_i32_9 : i32
    %12 = arith.extui %11 : i1 to i32
    %c0_i32_10 = arith.constant 0 : i32
    %13 = arith.cmpi ne, %12, %c0_i32_10 : i32
    scf.if %13 {
      %c0_11 = arith.constant 0 : index
      %c0_12 = arith.constant 0 : index
      %14 = vector.load %arg8[%c0_11, %c0_12] : memref<16x128xf32, #tpu.memory_space<vmem>>, vector<16x128xf32>
      %c0_13 = arith.constant 0 : index
      %c0_14 = arith.constant 0 : index
      %c0_15 = arith.constant 0 : index
      %15 = vector.load %arg6[%c0_13, %c0_14, %c0_15] : memref<1x1x128xf32, #tpu.memory_space<vmem>>, vector<1x1x128xf32>
      %16 = vector.shape_cast %15 : vector<1x1x128xf32> to vector<1x128xf32>
      %17 = vector.broadcast %16 : vector<1x128xf32> to vector<16x128xf32>
      %18 = arith.addf %14, %17 : vector<16x128xf32>
      %19 = arith.truncf %18 : vector<16x128xf32> to vector<16x128xbf16>
      %c0_16 = arith.constant 0 : index
      %c0_17 = arith.constant 0 : index
      %c0_18 = arith.constant 0 : index
      %20 = vector.load %arg7[%c0_16, %c0_17, %c0_18] : memref<1x16x128xbf16, #tpu.memory_space<vmem>>, vector<1x16x128xbf16>
      %21 = vector.shape_cast %20 : vector<1x16x128xbf16> to vector<16x128xbf16>
      %22 = vector.shape_cast %19 : vector<16x128xbf16> to vector<1x16x128xbf16>
      tpu.vector_store %arg7[%c0_16, %c0_17, %c0_18], %22 {strides = array<i32>} : memref<1x16x128xbf16, #tpu.memory_space<vmem>>, vector<1x16x128xbf16>,
    } else {
    }
    return
  }
  func.func @transform_0(%arg0: i32, %arg1: i32, %arg2: i32, %arg3: i32) -> (i32, i32) {
    %c0_i32 = arith.constant 0 : i32
    return %arg1, %arg3 : i32, i32
  }
  func.func @transform_1(%arg0: i32, %arg1: i32, %arg2: i32, %arg3: i32) -> (i32, i32, i32) {
    %c1_i32 = arith.constant 1 : i32
    %0 = arith.addi %c1_i32, %arg0 : i32
    %c0_i32 = arith.constant 0 : i32
    return %0, %arg3, %arg2 : i32, i32, i32
  }
  func.func @transform_2(%arg0: i32, %arg1: i32, %arg2: i32, %arg3: i32) -> (i32, i32, i32) {
    %c1_i32 = arith.constant 1 : i32
    %0 = arith.addi %c1_i32, %arg0 : i32
    %c0_i32 = arith.constant 0 : i32
    %c0_i32_0 = arith.constant 0 : i32
    return %0, %c0_i32, %arg2 : i32, i32, i32
  }
  func.func @transform_3(%arg0: i32, %arg1: i32, %arg2: i32, %arg3: i32) -> (i32, i32, i32) {
    %c0_i32 = arith.constant 0 : i32
    return %arg0, %arg1, %arg2 : i32, i32, i32
  }
}

module attributes {stable_mosaic.version = 11 : i64} {
  func.func @_linear_kernel(%arg0: i32, %arg1: i32, %arg2: i32, %arg3: i32, %arg4: memref<16x128xf32, #tpu.memory_space<vmem>>, %arg5: memref<1x128x128xbf16, #tpu.memory_space<vmem>>, %arg6: memref<1x1x128xf32, #tpu.memory_space<vmem>>, %arg7: memref<1x16x128xbf16, #tpu.memory_space<vmem>>, %arg8: memref<16x128xf32, #tpu.memory_space<vmem>>) attributes {dimension_semantics = [#tpu.dimension_semantics<parallel>, #tpu.dimension_semantics<parallel>, #tpu.dimension_semantics<parallel>, #tpu.dimension_semantics<arbitrary>], iteration_bounds = array<i64: 1, 1, 1, 1>, scalar_prefetch = 0 : i64, scratch_operands = 1 : i64, tpu.core_type = #tpu.core_type<tc>, window_params = [{transform_indices = @transform_0, window_bounds = array<i64: 16, 128>}, {transform_indices = @transform_1, window_bounds = array<i64: 1, 128, 128>}, {transform_indices = @transform_2, window_bounds = array<i64: 1, 1, 128>}, {transform_indices = @transform_3, window_bounds = array<i64: 1, 16, 128>}]} {
    %c0_i32 = arith.constant 0 : i32
    %0 = arith.cmpi eq, %arg3, %c0_i32 : i32
    %1 = arith.extui %0 : i1 to i32
    %c0_i32_0 = arith.constant 0 : i32
    %2 = arith.cmpi ne, %1, %c0_i32_0 : i32
    scf.if %2 {
      %cst_11 = arith.constant 0.000000e+00 : f32
      %14 = vector.broadcast %cst_11 : f32 to vector<16x128xf32>
      %c0_12 = arith.constant 0 : index
      %c0_13 = arith.constant 0 : index
      %15 = vector.load %arg8[%c0_12, %c0_13] : memref<16x128xf32, #tpu.memory_space<vmem>>, vector<16x128xf32>
      tpu.vector_store %arg8[%c0_12, %c0_13], %14 {strides = array<i32>} : memref<16x128xf32, #tpu.memory_space<vmem>>, vector<16x128xf32>,
    } else {
    }
    %c0 = arith.constant 0 : index
    %c0_1 = arith.constant 0 : index
    %3 = vector.load %arg4[%c0, %c0_1] : memref<16x128xf32, #tpu.memory_space<vmem>>, vector<16x128xf32>
    %4 = arith.truncf %3 : vector<16x128xf32> to vector<16x128xbf16>
    %c0_2 = arith.constant 0 : index
    %c0_3 = arith.constant 0 : index
    %c0_4 = arith.constant 0 : index
    %5 = vector.load %arg5[%c0_2, %c0_3, %c0_4] : memref<1x128x128xbf16, #tpu.memory_space<vmem>>, vector<1x128x128xbf16>
    %6 = vector.shape_cast %5 : vector<1x128x128xbf16> to vector<128x128xbf16>
    %c0_5 = arith.constant 0 : index
    %c0_6 = arith.constant 0 : index
    %7 = vector.load %arg8[%c0_5, %c0_6] : memref<16x128xf32, #tpu.memory_space<vmem>>, vector<16x128xf32>
    %cst = arith.constant dense<0.000000e+00> : vector<16x128xf32>
    %8 = tpu.matmul %4, %6, %cst {dimension_numbers = #tpu.dot_dimension_numbers<[1], [0], [0], [1], [0, 0, 1, 1], [], []>} : vector<16x128xbf16>, vector<128x128xbf16>, vector<16x128xf32> -> vector<16x128xf32>
    %9 = arith.addf %7, %8 : vector<16x128xf32>
    %c0_7 = arith.constant 0 : index
    %c0_8 = arith.constant 0 : index
    %10 = vector.load %arg8[%c0_7, %c0_8] : memref<16x128xf32, #tpu.memory_space<vmem>>, vector<16x128xf32>
    tpu.vector_store %arg8[%c0_7, %c0_8], %9 {strides = array<i32>} : memref<16x128xf32, #tpu.memory_space<vmem>>, vector<16x128xf32>,
    %c0_i32_9 = arith.constant 0 : i32
    %11 = arith.cmpi eq, %arg3, %c0_i32_9 : i32
    %12 = arith.extui %11 : i1 to i32
    %c0_i32_10 = arith.constant 0 : i32
    %13 = arith.cmpi ne, %12, %c0_i32_10 : i32
    scf.if %13 {
      %c0_11 = arith.constant 0 : index
      %c0_12 = arith.constant 0 : index
      %14 = vector.load %arg8[%c0_11, %c0_12] : memref<16x128xf32, #tpu.memory_space<vmem>>, vector<16x128xf32>
      %c0_13 = arith.constant 0 : index
      %c0_14 = arith.constant 0 : index
      %c0_15 = arith.constant 0 : index
      %15 = vector.load %arg6[%c0_13, %c0_14, %c0_15] : memref<1x1x128xf32, #tpu.memory_space<vmem>>, vector<1x1x128xf32>
      %16 = vector.shape_cast %15 : vector<1x1x128xf32> to vector<1x128xf32>
      %17 = vector.broadcast %16 : vector<1x128xf32> to vector<16x128xf32>
      %18 = arith.addf %14, %17 : vector<16x128xf32>
      %19 = arith.truncf %18 : vector<16x128xf32> to vector<16x128xbf16>
      %c0_16 = arith.constant 0 : index
      %c0_17 = arith.constant 0 : index
      %c0_18 = arith.constant 0 : index
      %20 = vector.load %arg7[%c0_16, %c0_17, %c0_18] : memref<1x16x128xbf16, #tpu.memory_space<vmem>>, vector<1x16x128xbf16>
      %21 = vector.shape_cast %20 : vector<1x16x128xbf16> to vector<16x128xbf16>
      %22 = vector.shape_cast %19 : vector<16x128xbf16> to vector<1x16x128xbf16>
      tpu.vector_store %arg7[%c0_16, %c0_17, %c0_18], %22 {strides = array<i32>} : memref<1x16x128xbf16, #tpu.memory_space<vmem>>, vector<1x16x128xbf16>,
    } else {
    }
    return
  }
  func.func @transform_0(%arg0: i32, %arg1: i32, %arg2: i32, %arg3: i32) -> (i32, i32) {
    %c0_i32 = arith.constant 0 : i32
    return %arg1, %arg3 : i32, i32
  }
  func.func @transform_1(%arg0: i32, %arg1: i32, %arg2: i32, %arg3: i32) -> (i32, i32, i32) {
    %c2_i32 = arith.constant 2 : i32
    %0 = arith.addi %c2_i32, %arg0 : i32
    %c0_i32 = arith.constant 0 : i32
    return %0, %arg3, %arg2 : i32, i32, i32
  }
  func.func @transform_2(%arg0: i32, %arg1: i32, %arg2: i32, %arg3: i32) -> (i32, i32, i32) {
    %c2_i32 = arith.constant 2 : i32
    %0 = arith.addi %c2_i32, %arg0 : i32
    %c0_i32 = arith.constant 0 : i32
    %c0_i32_0 = arith.constant 0 : i32
    return %0, %c0_i32, %arg2 : i32, i32, i32
  }
  func.func @transform_3(%arg0: i32, %arg1: i32, %arg2: i32, %arg3: i32) -> (i32, i32, i32) {
    %c0_i32 = arith.constant 0 : i32
    return %arg0, %arg1, %arg2 : i32, i32, i32
  }
}

module attributes {stable_mosaic.version = 11 : i64} {
  func.func @_flash_attn_kernel(%arg0: i32, %arg1: i32, %arg2: i32, %arg3: memref<1x1x8x32xbf16, #tpu.memory_space<vmem>>, %arg4: memref<1x1x8x32xbf16, #tpu.memory_space<vmem>>, %arg5: memref<1x1x8x32xbf16, #tpu.memory_space<vmem>>, %arg6: memref<1x8x32xbf16, #tpu.memory_space<vmem>>, %arg7: memref<8x4xf32, #tpu.memory_space<vmem>>, %arg8: memref<8x4xf32, #tpu.memory_space<vmem>>, %arg9: memref<8x32xf32, #tpu.memory_space<vmem>>) attributes {dimension_semantics = [#tpu.dimension_semantics<parallel>, #tpu.dimension_semantics<parallel>, #tpu.dimension_semantics<arbitrary>], iteration_bounds = array<i64: 2, 1, 1>, scalar_prefetch = 0 : i64, scratch_operands = 3 : i64, tpu.core_type = #tpu.core_type<tc>, window_params = [{transform_indices = @transform_0, window_bounds = array<i64: 1, 1, 8, 32>}, {transform_indices = @transform_1, window_bounds = array<i64: 1, 1, 8, 32>}, {transform_indices = @transform_2, window_bounds = array<i64: 1, 1, 8, 32>}, {transform_indices = @transform_3, window_bounds = array<i64: 1, 8, 32>}]} {
    %c0_i32 = arith.constant 0 : i32
    %0 = arith.cmpi eq, %arg2, %c0_i32 : i32
    %1 = arith.extui %0 : i1 to i32
    %c0_i32_0 = arith.constant 0 : i32
    %2 = arith.cmpi ne, %1, %c0_i32_0 : i32
    scf.if %2 {
      %cst_107 = arith.constant 0xFF800000 : f32
      %126 = vector.broadcast %cst_107 : f32 to vector<8x4xf32>
      %c0_108 = arith.constant 0 : index
      %c0_109 = arith.constant 0 : index
      %127 = vector.load %arg7[%c0_108, %c0_109] : memref<8x4xf32, #tpu.memory_space<vmem>>, vector<8x4xf32>
      tpu.vector_store %arg7[%c0_108, %c0_109], %126 {strides = array<i32>} : memref<8x4xf32, #tpu.memory_space<vmem>>, vector<8x4xf32>,
      %cst_110 = arith.constant 0.000000e+00 : f32
      %128 = vector.broadcast %cst_110 : f32 to vector<8x4xf32>
      %c0_111 = arith.constant 0 : index
      %c0_112 = arith.constant 0 : index
      %129 = vector.load %arg8[%c0_111, %c0_112] : memref<8x4xf32, #tpu.memory_space<vmem>>, vector<8x4xf32>
      tpu.vector_store %arg8[%c0_111, %c0_112], %128 {strides = array<i32>} : memref<8x4xf32, #tpu.memory_space<vmem>>, vector<8x4xf32>,
      %cst_113 = arith.constant 0.000000e+00 : f32
      %130 = vector.broadcast %cst_113 : f32 to vector<8x32xf32>
      %c0_114 = arith.constant 0 : index
      %c0_115 = arith.constant 0 : index
      %131 = vector.load %arg9[%c0_114, %c0_115] : memref<8x32xf32, #tpu.memory_space<vmem>>, vector<8x32xf32>
      tpu.vector_store %arg9[%c0_114, %c0_115], %130 {strides = array<i32>} : memref<8x32xf32, #tpu.memory_space<vmem>>, vector<8x32xf32>,
    } else {
    }
    %c0 = arith.constant 0 : index
    %c0_1 = arith.constant 0 : index
    %c0_2 = arith.constant 0 : index
    %c0_3 = arith.constant 0 : index
    %3 = vector.load %arg3[%c0, %c0_1, %c0_2, %c0_3] : memref<1x1x8x32xbf16, #tpu.memory_space<vmem>>, vector<1x1x8x8xbf16>
    %4 = vector.shape_cast %3 : vector<1x1x8x8xbf16> to vector<8x8xbf16>
    %c0_4 = arith.constant 0 : index
    %c0_5 = arith.constant 0 : index
    %c0_6 = arith.constant 0 : index
    %c0_7 = arith.constant 0 : index
    %5 = vector.load %arg4[%c0_4, %c0_5, %c0_6, %c0_7] : memref<1x1x8x32xbf16, #tpu.memory_space<vmem>>, vector<1x1x8x8xbf16>
    %6 = vector.shape_cast %5 : vector<1x1x8x8xbf16> to vector<8x8xbf16>
    %cst = arith.constant dense<0.000000e+00> : vector<8x8xf32>
    %7 = tpu.matmul %4, %6, %cst {dimension_numbers = #tpu.dot_dimension_numbers<[1], [1], [0], [0], [0, 0, 1, 0], [], []>} : vector<8x8xbf16>, vector<8x8xbf16>, vector<8x8xf32> -> vector<8x8xf32>
    %c0_8 = arith.constant 0 : index
    %c0_9 = arith.constant 0 : index
    %8 = vector.load %arg7[%c0_8, %c0_9] : memref<8x4xf32, #tpu.memory_space<vmem>>, vector<8x1xf32>
    %cst_10 = arith.constant dense<0xFF800000> : vector<8xf32>
    %9 = vector.multi_reduction <maximumf>, %7, %cst_10 [1] : vector<8x8xf32> to vector<8xf32>
    %10 = vector.shape_cast %9 : vector<8xf32> to vector<8x1xf32>
    %11 = arith.maximumf %8, %10 : vector<8x1xf32>
    %12 = arith.subf %8, %11 : vector<8x1xf32>
    %13 = math.exp %12 : vector<8x1xf32>
    %14 = vector.broadcast %11 : vector<8x1xf32> to vector<8x8xf32>
    %15 = arith.subf %7, %14 : vector<8x8xf32>
    %16 = math.exp %15 : vector<8x8xf32>
    %c0_11 = arith.constant 0 : index
    %c0_12 = arith.constant 0 : index
    %17 = vector.load %arg8[%c0_11, %c0_12] : memref<8x4xf32, #tpu.memory_space<vmem>>, vector<8x1xf32>
    %18 = arith.mulf %13, %17 : vector<8x1xf32>
    %cst_13 = arith.constant dense<0.000000e+00> : vector<8xf32>
    %19 = vector.multi_reduction <add>, %16, %cst_13 [1] : vector<8x8xf32> to vector<8xf32>
    %20 = vector.shape_cast %19 : vector<8xf32> to vector<8x1xf32>
    %21 = arith.addf %18, %20 : vector<8x1xf32>
    %c0_14 = arith.constant 0 : index
    %c0_15 = arith.constant 0 : index
    %22 = vector.load %arg8[%c0_14, %c0_15] : memref<8x4xf32, #tpu.memory_space<vmem>>, vector<8x1xf32>
    tpu.vector_store %arg8[%c0_14, %c0_15], %21 {strides = array<i32>} : memref<8x4xf32, #tpu.memory_space<vmem>>, vector<8x1xf32>,
    %c0_16 = arith.constant 0 : index
    %c0_17 = arith.constant 0 : index
    %23 = vector.load %arg7[%c0_16, %c0_17] : memref<8x4xf32, #tpu.memory_space<vmem>>, vector<8x1xf32>
    tpu.vector_store %arg7[%c0_16, %c0_17], %11 {strides = array<i32>} : memref<8x4xf32, #tpu.memory_space<vmem>>, vector<8x1xf32>,
    %c0_18 = arith.constant 0 : index
    %c0_19 = arith.constant 0 : index
    %c0_20 = arith.constant 0 : index
    %c0_21 = arith.constant 0 : index
    %24 = vector.load %arg5[%c0_18, %c0_19, %c0_20, %c0_21] : memref<1x1x8x32xbf16, #tpu.memory_space<vmem>>, vector<1x1x8x8xbf16>
    %25 = vector.shape_cast %24 : vector<1x1x8x8xbf16> to vector<8x8xbf16>
    %26 = arith.truncf %16 : vector<8x8xf32> to vector<8x8xbf16>
    %cst_22 = arith.constant dense<0.000000e+00> : vector<8x8xf32>
    %27 = tpu.matmul %26, %25, %cst_22 {dimension_numbers = #tpu.dot_dimension_numbers<[1], [0], [0], [1], [0, 0, 1, 1], [], []>} : vector<8x8xbf16>, vector<8x8xbf16>, vector<8x8xf32> -> vector<8x8xf32>
    %c0_23 = arith.constant 0 : index
    %c0_24 = arith.constant 0 : index
    %28 = vector.load %arg9[%c0_23, %c0_24] : memref<8x32xf32, #tpu.memory_space<vmem>>, vector<8x8xf32>
    %29 = vector.broadcast %13 : vector<8x1xf32> to vector<8x8xf32>
    %30 = arith.mulf %29, %28 : vector<8x8xf32>
    %31 = arith.addf %30, %27 : vector<8x8xf32>
    %c0_25 = arith.constant 0 : index
    %c0_26 = arith.constant 0 : index
    %32 = vector.load %arg9[%c0_25, %c0_26] : memref<8x32xf32, #tpu.memory_space<vmem>>, vector<8x8xf32>
    tpu.vector_store %arg9[%c0_25, %c0_26], %31 {strides = array<i32>} : memref<8x32xf32, #tpu.memory_space<vmem>>, vector<8x8xf32>,
    %c0_27 = arith.constant 0 : index
    %c0_28 = arith.constant 0 : index
    %c0_29 = arith.constant 0 : index
    %c8 = arith.constant 8 : index
    %33 = vector.load %arg3[%c0_27, %c0_28, %c0_29, %c8] : memref<1x1x8x32xbf16, #tpu.memory_space<vmem>>, vector<1x1x8x8xbf16>
    %34 = vector.shape_cast %33 : vector<1x1x8x8xbf16> to vector<8x8xbf16>
    %c0_30 = arith.constant 0 : index
    %c0_31 = arith.constant 0 : index
    %c0_32 = arith.constant 0 : index
    %c8_33 = arith.constant 8 : index
    %35 = vector.load %arg4[%c0_30, %c0_31, %c0_32, %c8_33] : memref<1x1x8x32xbf16, #tpu.memory_space<vmem>>, vector<1x1x8x8xbf16>
    %36 = vector.shape_cast %35 : vector<1x1x8x8xbf16> to vector<8x8xbf16>
    %cst_34 = arith.constant dense<0.000000e+00> : vector<8x8xf32>
    %37 = tpu.matmul %34, %36, %cst_34 {dimension_numbers = #tpu.dot_dimension_numbers<[1], [1], [0], [0], [0, 0, 1, 0], [], []>} : vector<8x8xbf16>, vector<8x8xbf16>, vector<8x8xf32> -> vector<8x8xf32>
    %c0_35 = arith.constant 0 : index
    %c1 = arith.constant 1 : index
    %38 = vector.load %arg7[%c0_35, %c1] : memref<8x4xf32, #tpu.memory_space<vmem>>, vector<8x1xf32>
    %cst_36 = arith.constant dense<0xFF800000> : vector<8xf32>
    %39 = vector.multi_reduction <maximumf>, %37, %cst_36 [1] : vector<8x8xf32> to vector<8xf32>
    %40 = vector.shape_cast %39 : vector<8xf32> to vector<8x1xf32>
    %41 = arith.maximumf %38, %40 : vector<8x1xf32>
    %42 = arith.subf %38, %41 : vector<8x1xf32>
    %43 = math.exp %42 : vector<8x1xf32>
    %44 = vector.broadcast %41 : vector<8x1xf32> to vector<8x8xf32>
    %45 = arith.subf %37, %44 : vector<8x8xf32>
    %46 = math.exp %45 : vector<8x8xf32>
    %c0_37 = arith.constant 0 : index
    %c1_38 = arith.constant 1 : index
    %47 = vector.load %arg8[%c0_37, %c1_38] : memref<8x4xf32, #tpu.memory_space<vmem>>, vector<8x1xf32>
    %48 = arith.mulf %43, %47 : vector<8x1xf32>
    %cst_39 = arith.constant dense<0.000000e+00> : vector<8xf32>
    %49 = vector.multi_reduction <add>, %46, %cst_39 [1] : vector<8x8xf32> to vector<8xf32>
    %50 = vector.shape_cast %49 : vector<8xf32> to vector<8x1xf32>
    %51 = arith.addf %48, %50 : vector<8x1xf32>
    %c0_40 = arith.constant 0 : index
    %c1_41 = arith.constant 1 : index
    %52 = vector.load %arg8[%c0_40, %c1_41] : memref<8x4xf32, #tpu.memory_space<vmem>>, vector<8x1xf32>
    tpu.vector_store %arg8[%c0_40, %c1_41], %51 {strides = array<i32>} : memref<8x4xf32, #tpu.memory_space<vmem>>, vector<8x1xf32>,
    %c0_42 = arith.constant 0 : index
    %c1_43 = arith.constant 1 : index
    %53 = vector.load %arg7[%c0_42, %c1_43] : memref<8x4xf32, #tpu.memory_space<vmem>>, vector<8x1xf32>
    tpu.vector_store %arg7[%c0_42, %c1_43], %41 {strides = array<i32>} : memref<8x4xf32, #tpu.memory_space<vmem>>, vector<8x1xf32>,
    %c0_44 = arith.constant 0 : index
    %c0_45 = arith.constant 0 : index
    %c0_46 = arith.constant 0 : index
    %c8_47 = arith.constant 8 : index
    %54 = vector.load %arg5[%c0_44, %c0_45, %c0_46, %c8_47] : memref<1x1x8x32xbf16, #tpu.memory_space<vmem>>, vector<1x1x8x8xbf16>
    %55 = vector.shape_cast %54 : vector<1x1x8x8xbf16> to vector<8x8xbf16>
    %56 = arith.truncf %46 : vector<8x8xf32> to vector<8x8xbf16>
    %cst_48 = arith.constant dense<0.000000e+00> : vector<8x8xf32>
    %57 = tpu.matmul %56, %55, %cst_48 {dimension_numbers = #tpu.dot_dimension_numbers<[1], [0], [0], [1], [0, 0, 1, 1], [], []>} : vector<8x8xbf16>, vector<8x8xbf16>, vector<8x8xf32> -> vector<8x8xf32>
    %c0_49 = arith.constant 0 : index
    %c8_50 = arith.constant 8 : index
    %58 = vector.load %arg9[%c0_49, %c8_50] : memref<8x32xf32, #tpu.memory_space<vmem>>, vector<8x8xf32>
    %59 = vector.broadcast %43 : vector<8x1xf32> to vector<8x8xf32>
    %60 = arith.mulf %59, %58 : vector<8x8xf32>
    %61 = arith.addf %60, %57 : vector<8x8xf32>
    %c0_51 = arith.constant 0 : index
    %c8_52 = arith.constant 8 : index
    %62 = vector.load %arg9[%c0_51, %c8_52] : memref<8x32xf32, #tpu.memory_space<vmem>>, vector<8x8xf32>
    tpu.vector_store %arg9[%c0_51, %c8_52], %61 {strides = array<i32>} : memref<8x32xf32, #tpu.memory_space<vmem>>, vector<8x8xf32>,
    %c0_53 = arith.constant 0 : index
    %c0_54 = arith.constant 0 : index
    %c0_55 = arith.constant 0 : index
    %c16 = arith.constant 16 : index
    %63 = vector.load %arg3[%c0_53, %c0_54, %c0_55, %c16] : memref<1x1x8x32xbf16, #tpu.memory_space<vmem>>, vector<1x1x8x8xbf16>
    %64 = vector.shape_cast %63 : vector<1x1x8x8xbf16> to vector<8x8xbf16>
    %c0_56 = arith.constant 0 : index
    %c0_57 = arith.constant 0 : index
    %c0_58 = arith.constant 0 : index
    %c16_59 = arith.constant 16 : index
    %65 = vector.load %arg4[%c0_56, %c0_57, %c0_58, %c16_59] : memref<1x1x8x32xbf16, #tpu.memory_space<vmem>>, vector<1x1x8x8xbf16>
    %66 = vector.shape_cast %65 : vector<1x1x8x8xbf16> to vector<8x8xbf16>
    %cst_60 = arith.constant dense<0.000000e+00> : vector<8x8xf32>
    %67 = tpu.matmul %64, %66, %cst_60 {dimension_numbers = #tpu.dot_dimension_numbers<[1], [1], [0], [0], [0, 0, 1, 0], [], []>} : vector<8x8xbf16>, vector<8x8xbf16>, vector<8x8xf32> -> vector<8x8xf32>
    %c0_61 = arith.constant 0 : index
    %c2 = arith.constant 2 : index
    %68 = vector.load %arg7[%c0_61, %c2] : memref<8x4xf32, #tpu.memory_space<vmem>>, vector<8x1xf32>
    %cst_62 = arith.constant dense<0xFF800000> : vector<8xf32>
    %69 = vector.multi_reduction <maximumf>, %67, %cst_62 [1] : vector<8x8xf32> to vector<8xf32>
    %70 = vector.shape_cast %69 : vector<8xf32> to vector<8x1xf32>
    %71 = arith.maximumf %68, %70 : vector<8x1xf32>
    %72 = arith.subf %68, %71 : vector<8x1xf32>
    %73 = math.exp %72 : vector<8x1xf32>
    %74 = vector.broadcast %71 : vector<8x1xf32> to vector<8x8xf32>
    %75 = arith.subf %67, %74 : vector<8x8xf32>
    %76 = math.exp %75 : vector<8x8xf32>
    %c0_63 = arith.constant 0 : index
    %c2_64 = arith.constant 2 : index
    %77 = vector.load %arg8[%c0_63, %c2_64] : memref<8x4xf32, #tpu.memory_space<vmem>>, vector<8x1xf32>
    %78 = arith.mulf %73, %77 : vector<8x1xf32>
    %cst_65 = arith.constant dense<0.000000e+00> : vector<8xf32>
    %79 = vector.multi_reduction <add>, %76, %cst_65 [1] : vector<8x8xf32> to vector<8xf32>
    %80 = vector.shape_cast %79 : vector<8xf32> to vector<8x1xf32>
    %81 = arith.addf %78, %80 : vector<8x1xf32>
    %c0_66 = arith.constant 0 : index
    %c2_67 = arith.constant 2 : index
    %82 = vector.load %arg8[%c0_66, %c2_67] : memref<8x4xf32, #tpu.memory_space<vmem>>, vector<8x1xf32>
    tpu.vector_store %arg8[%c0_66, %c2_67], %81 {strides = array<i32>} : memref<8x4xf32, #tpu.memory_space<vmem>>, vector<8x1xf32>,
    %c0_68 = arith.constant 0 : index
    %c2_69 = arith.constant 2 : index
    %83 = vector.load %arg7[%c0_68, %c2_69] : memref<8x4xf32, #tpu.memory_space<vmem>>, vector<8x1xf32>
    tpu.vector_store %arg7[%c0_68, %c2_69], %71 {strides = array<i32>} : memref<8x4xf32, #tpu.memory_space<vmem>>, vector<8x1xf32>,
    %c0_70 = arith.constant 0 : index
    %c0_71 = arith.constant 0 : index
    %c0_72 = arith.constant 0 : index
    %c16_73 = arith.constant 16 : index
    %84 = vector.load %arg5[%c0_70, %c0_71, %c0_72, %c16_73] : memref<1x1x8x32xbf16, #tpu.memory_space<vmem>>, vector<1x1x8x8xbf16>
    %85 = vector.shape_cast %84 : vector<1x1x8x8xbf16> to vector<8x8xbf16>
    %86 = arith.truncf %76 : vector<8x8xf32> to vector<8x8xbf16>
    %cst_74 = arith.constant dense<0.000000e+00> : vector<8x8xf32>
    %87 = tpu.matmul %86, %85, %cst_74 {dimension_numbers = #tpu.dot_dimension_numbers<[1], [0], [0], [1], [0, 0, 1, 1], [], []>} : vector<8x8xbf16>, vector<8x8xbf16>, vector<8x8xf32> -> vector<8x8xf32>
    %c0_75 = arith.constant 0 : index
    %c16_76 = arith.constant 16 : index
    %88 = vector.load %arg9[%c0_75, %c16_76] : memref<8x32xf32, #tpu.memory_space<vmem>>, vector<8x8xf32>
    %89 = vector.broadcast %73 : vector<8x1xf32> to vector<8x8xf32>
    %90 = arith.mulf %89, %88 : vector<8x8xf32>
    %91 = arith.addf %90, %87 : vector<8x8xf32>
    %c0_77 = arith.constant 0 : index
    %c16_78 = arith.constant 16 : index
    %92 = vector.load %arg9[%c0_77, %c16_78] : memref<8x32xf32, #tpu.memory_space<vmem>>, vector<8x8xf32>
    tpu.vector_store %arg9[%c0_77, %c16_78], %91 {strides = array<i32>} : memref<8x32xf32, #tpu.memory_space<vmem>>, vector<8x8xf32>,
    %c0_79 = arith.constant 0 : index
    %c0_80 = arith.constant 0 : index
    %c0_81 = arith.constant 0 : index
    %c24 = arith.constant 24 : index
    %93 = vector.load %arg3[%c0_79, %c0_80, %c0_81, %c24] : memref<1x1x8x32xbf16, #tpu.memory_space<vmem>>, vector<1x1x8x8xbf16>
    %94 = vector.shape_cast %93 : vector<1x1x8x8xbf16> to vector<8x8xbf16>
    %c0_82 = arith.constant 0 : index
    %c0_83 = arith.constant 0 : index
    %c0_84 = arith.constant 0 : index
    %c24_85 = arith.constant 24 : index
    %95 = vector.load %arg4[%c0_82, %c0_83, %c0_84, %c24_85] : memref<1x1x8x32xbf16, #tpu.memory_space<vmem>>, vector<1x1x8x8xbf16>
    %96 = vector.shape_cast %95 : vector<1x1x8x8xbf16> to vector<8x8xbf16>
    %cst_86 = arith.constant dense<0.000000e+00> : vector<8x8xf32>
    %97 = tpu.matmul %94, %96, %cst_86 {dimension_numbers = #tpu.dot_dimension_numbers<[1], [1], [0], [0], [0, 0, 1, 0], [], []>} : vector<8x8xbf16>, vector<8x8xbf16>, vector<8x8xf32> -> vector<8x8xf32>
    %c0_87 = arith.constant 0 : index
    %c3 = arith.constant 3 : index
    %98 = vector.load %arg7[%c0_87, %c3] : memref<8x4xf32, #tpu.memory_space<vmem>>, vector<8x1xf32>
    %cst_88 = arith.constant dense<0xFF800000> : vector<8xf32>
    %99 = vector.multi_reduction <maximumf>, %97, %cst_88 [1] : vector<8x8xf32> to vector<8xf32>
    %100 = vector.shape_cast %99 : vector<8xf32> to vector<8x1xf32>
    %101 = arith.maximumf %98, %100 : vector<8x1xf32>
    %102 = arith.subf %98, %101 : vector<8x1xf32>
    %103 = math.exp %102 : vector<8x1xf32>
    %104 = vector.broadcast %101 : vector<8x1xf32> to vector<8x8xf32>
    %105 = arith.subf %97, %104 : vector<8x8xf32>
    %106 = math.exp %105 : vector<8x8xf32>
    %c0_89 = arith.constant 0 : index
    %c3_90 = arith.constant 3 : index
    %107 = vector.load %arg8[%c0_89, %c3_90] : memref<8x4xf32, #tpu.memory_space<vmem>>, vector<8x1xf32>
    %108 = arith.mulf %103, %107 : vector<8x1xf32>
    %cst_91 = arith.constant dense<0.000000e+00> : vector<8xf32>
    %109 = vector.multi_reduction <add>, %106, %cst_91 [1] : vector<8x8xf32> to vector<8xf32>
    %110 = vector.shape_cast %109 : vector<8xf32> to vector<8x1xf32>
    %111 = arith.addf %108, %110 : vector<8x1xf32>
    %c0_92 = arith.constant 0 : index
    %c3_93 = arith.constant 3 : index
    %112 = vector.load %arg8[%c0_92, %c3_93] : memref<8x4xf32, #tpu.memory_space<vmem>>, vector<8x1xf32>
    tpu.vector_store %arg8[%c0_92, %c3_93], %111 {strides = array<i32>} : memref<8x4xf32, #tpu.memory_space<vmem>>, vector<8x1xf32>,
    %c0_94 = arith.constant 0 : index
    %c3_95 = arith.constant 3 : index
    %113 = vector.load %arg7[%c0_94, %c3_95] : memref<8x4xf32, #tpu.memory_space<vmem>>, vector<8x1xf32>
    tpu.vector_store %arg7[%c0_94, %c3_95], %101 {strides = array<i32>} : memref<8x4xf32, #tpu.memory_space<vmem>>, vector<8x1xf32>,
    %c0_96 = arith.constant 0 : index
    %c0_97 = arith.constant 0 : index
    %c0_98 = arith.constant 0 : index
    %c24_99 = arith.constant 24 : index
    %114 = vector.load %arg5[%c0_96, %c0_97, %c0_98, %c24_99] : memref<1x1x8x32xbf16, #tpu.memory_space<vmem>>, vector<1x1x8x8xbf16>
    %115 = vector.shape_cast %114 : vector<1x1x8x8xbf16> to vector<8x8xbf16>
    %116 = arith.truncf %106 : vector<8x8xf32> to vector<8x8xbf16>
    %cst_100 = arith.constant dense<0.000000e+00> : vector<8x8xf32>
    %117 = tpu.matmul %116, %115, %cst_100 {dimension_numbers = #tpu.dot_dimension_numbers<[1], [0], [0], [1], [0, 0, 1, 1], [], []>} : vector<8x8xbf16>, vector<8x8xbf16>, vector<8x8xf32> -> vector<8x8xf32>
    %c0_101 = arith.constant 0 : index
    %c24_102 = arith.constant 24 : index
    %118 = vector.load %arg9[%c0_101, %c24_102] : memref<8x32xf32, #tpu.memory_space<vmem>>, vector<8x8xf32>
    %119 = vector.broadcast %103 : vector<8x1xf32> to vector<8x8xf32>
    %120 = arith.mulf %119, %118 : vector<8x8xf32>
    %121 = arith.addf %120, %117 : vector<8x8xf32>
    %c0_103 = arith.constant 0 : index
    %c24_104 = arith.constant 24 : index
    %122 = vector.load %arg9[%c0_103, %c24_104] : memref<8x32xf32, #tpu.memory_space<vmem>>, vector<8x8xf32>
    tpu.vector_store %arg9[%c0_103, %c24_104], %121 {strides = array<i32>} : memref<8x32xf32, #tpu.memory_space<vmem>>, vector<8x8xf32>,
    %c0_i32_105 = arith.constant 0 : i32
    %123 = arith.cmpi eq, %arg2, %c0_i32_105 : i32
    %124 = arith.extui %123 : i1 to i32
    %c0_i32_106 = arith.constant 0 : i32
    %125 = arith.cmpi ne, %124, %c0_i32_106 : i32
    scf.if %125 {
      %c0_107 = arith.constant 0 : index
      %c0_108 = arith.constant 0 : index
      %126 = vector.load %arg8[%c0_107, %c0_108] : memref<8x4xf32, #tpu.memory_space<vmem>>, vector<8x1xf32>
      %127 = tpu.reciprocal %126 : vector<8x1xf32> -> vector<8x1xf32>
      %c0_109 = arith.constant 0 : index
      %c0_110 = arith.constant 0 : index
      %128 = vector.load %arg9[%c0_109, %c0_110] : memref<8x32xf32, #tpu.memory_space<vmem>>, vector<8x8xf32>
      %129 = vector.broadcast %127 : vector<8x1xf32> to vector<8x8xf32>
      %130 = arith.mulf %128, %129 : vector<8x8xf32>
      %c0_111 = arith.constant 0 : index
      %c0_112 = arith.constant 0 : index
      %131 = vector.load %arg9[%c0_111, %c0_112] : memref<8x32xf32, #tpu.memory_space<vmem>>, vector<8x8xf32>
      tpu.vector_store %arg9[%c0_111, %c0_112], %130 {strides = array<i32>} : memref<8x32xf32, #tpu.memory_space<vmem>>, vector<8x8xf32>,
      %c0_113 = arith.constant 0 : index
      %c1_114 = arith.constant 1 : index
      %132 = vector.load %arg8[%c0_113, %c1_114] : memref<8x4xf32, #tpu.memory_space<vmem>>, vector<8x1xf32>
      %133 = tpu.reciprocal %132 : vector<8x1xf32> -> vector<8x1xf32>
      %c0_115 = arith.constant 0 : index
      %c8_116 = arith.constant 8 : index
      %134 = vector.load %arg9[%c0_115, %c8_116] : memref<8x32xf32, #tpu.memory_space<vmem>>, vector<8x8xf32>
      %135 = vector.broadcast %133 : vector<8x1xf32> to vector<8x8xf32>
      %136 = arith.mulf %134, %135 : vector<8x8xf32>
      %c0_117 = arith.constant 0 : index
      %c8_118 = arith.constant 8 : index
      %137 = vector.load %arg9[%c0_117, %c8_118] : memref<8x32xf32, #tpu.memory_space<vmem>>, vector<8x8xf32>
      tpu.vector_store %arg9[%c0_117, %c8_118], %136 {strides = array<i32>} : memref<8x32xf32, #tpu.memory_space<vmem>>, vector<8x8xf32>,
      %c0_119 = arith.constant 0 : index
      %c2_120 = arith.constant 2 : index
      %138 = vector.load %arg8[%c0_119, %c2_120] : memref<8x4xf32, #tpu.memory_space<vmem>>, vector<8x1xf32>
      %139 = tpu.reciprocal %138 : vector<8x1xf32> -> vector<8x1xf32>
      %c0_121 = arith.constant 0 : index
      %c16_122 = arith.constant 16 : index
      %140 = vector.load %arg9[%c0_121, %c16_122] : memref<8x32xf32, #tpu.memory_space<vmem>>, vector<8x8xf32>
      %141 = vector.broadcast %139 : vector<8x1xf32> to vector<8x8xf32>
      %142 = arith.mulf %140, %141 : vector<8x8xf32>
      %c0_123 = arith.constant 0 : index
      %c16_124 = arith.constant 16 : index
      %143 = vector.load %arg9[%c0_123, %c16_124] : memref<8x32xf32, #tpu.memory_space<vmem>>, vector<8x8xf32>
      tpu.vector_store %arg9[%c0_123, %c16_124], %142 {strides = array<i32>} : memref<8x32xf32, #tpu.memory_space<vmem>>, vector<8x8xf32>,
      %c0_125 = arith.constant 0 : index
      %c3_126 = arith.constant 3 : index
      %144 = vector.load %arg8[%c0_125, %c3_126] : memref<8x4xf32, #tpu.memory_space<vmem>>, vector<8x1xf32>
      %145 = tpu.reciprocal %144 : vector<8x1xf32> -> vector<8x1xf32>
      %c0_127 = arith.constant 0 : index
      %c24_128 = arith.constant 24 : index
      %146 = vector.load %arg9[%c0_127, %c24_128] : memref<8x32xf32, #tpu.memory_space<vmem>>, vector<8x8xf32>
      %147 = vector.broadcast %145 : vector<8x1xf32> to vector<8x8xf32>
      %148 = arith.mulf %146, %147 : vector<8x8xf32>
      %c0_129 = arith.constant 0 : index
      %c24_130 = arith.constant 24 : index
      %149 = vector.load %arg9[%c0_129, %c24_130] : memref<8x32xf32, #tpu.memory_space<vmem>>, vector<8x8xf32>
      tpu.vector_store %arg9[%c0_129, %c24_130], %148 {strides = array<i32>} : memref<8x32xf32, #tpu.memory_space<vmem>>, vector<8x8xf32>,
      %c0_131 = arith.constant 0 : index
      %c0_132 = arith.constant 0 : index
      %150 = vector.load %arg9[%c0_131, %c0_132] : memref<8x32xf32, #tpu.memory_space<vmem>>, vector<8x32xf32>
      %151 = arith.truncf %150 : vector<8x32xf32> to vector<8x32xbf16>
      %c0_133 = arith.constant 0 : index
      %c0_134 = arith.constant 0 : index
      %c0_135 = arith.constant 0 : index
      %152 = vector.load %arg6[%c0_133, %c0_134, %c0_135] : memref<1x8x32xbf16, #tpu.memory_space<vmem>>, vector<1x8x32xbf16>
      %153 = vector.shape_cast %152 : vector<1x8x32xbf16> to vector<8x32xbf16>
      %154 = vector.shape_cast %151 : vector<8x32xbf16> to vector<1x8x32xbf16>
      tpu.vector_store %arg6[%c0_133, %c0_134, %c0_135], %154 {strides = array<i32>} : memref<1x8x32xbf16, #tpu.memory_space<vmem>>, vector<1x8x32xbf16>,
    } else {
    }
    return
  }
  func.func @transform_0(%arg0: i32, %arg1: i32, %arg2: i32) -> (i32, i32, i32, i32) {
    %c0_i32 = arith.constant 0 : i32
    %c0_i32_0 = arith.constant 0 : i32
    %c0_i32_1 = arith.constant 0 : i32
    return %c0_i32, %arg0, %arg1, %c0_i32_0 : i32, i32, i32, i32
  }
  func.func @transform_1(%arg0: i32, %arg1: i32, %arg2: i32) -> (i32, i32, i32, i32) {
    %c0_i32 = arith.constant 0 : i32
    %c0_i32_0 = arith.constant 0 : i32
    %c0_i32_1 = arith.constant 0 : i32
    return %c0_i32, %arg0, %arg2, %c0_i32_0 : i32, i32, i32, i32
  }
  func.func @transform_2(%arg0: i32, %arg1: i32, %arg2: i32) -> (i32, i32, i32, i32) {
    %c0_i32 = arith.constant 0 : i32
    %c0_i32_0 = arith.constant 0 : i32
    %c0_i32_1 = arith.constant 0 : i32
    return %c0_i32, %arg0, %arg2, %c0_i32_0 : i32, i32, i32, i32
  }
  func.func @transform_3(%arg0: i32, %arg1: i32, %arg2: i32) -> (i32, i32, i32) {
    %c0_i32 = arith.constant 0 : i32
    %c0_i32_0 = arith.constant 0 : i32
    return %arg0, %arg1, %c0_i32 : i32, i32, i32
  }
}

module attributes {stable_mosaic.version = 11 : i64} {
  func.func @_linear_kernel(%arg0: i32, %arg1: i32, %arg2: i32, %arg3: i32, %arg4: memref<16x128xbf16, #tpu.memory_space<vmem>>, %arg5: memref<1x128x128xbf16, #tpu.memory_space<vmem>>, %arg6: memref<1x1x128xf32, #tpu.memory_space<vmem>>, %arg7: memref<1x16x128xf32, #tpu.memory_space<vmem>>, %arg8: memref<16x128xf32, #tpu.memory_space<vmem>>) attributes {dimension_semantics = [#tpu.dimension_semantics<parallel>, #tpu.dimension_semantics<parallel>, #tpu.dimension_semantics<parallel>, #tpu.dimension_semantics<arbitrary>], iteration_bounds = array<i64: 1, 1, 1, 1>, scalar_prefetch = 0 : i64, scratch_operands = 1 : i64, tpu.core_type = #tpu.core_type<tc>, window_params = [{transform_indices = @transform_0, window_bounds = array<i64: 16, 128>}, {transform_indices = @transform_1, window_bounds = array<i64: 1, 128, 128>}, {transform_indices = @transform_2, window_bounds = array<i64: 1, 1, 128>}, {transform_indices = @transform_3, window_bounds = array<i64: 1, 16, 128>}]} {
    %c0_i32 = arith.constant 0 : i32
    %0 = arith.cmpi eq, %arg3, %c0_i32 : i32
    %1 = arith.extui %0 : i1 to i32
    %c0_i32_0 = arith.constant 0 : i32
    %2 = arith.cmpi ne, %1, %c0_i32_0 : i32
    scf.if %2 {
      %cst_11 = arith.constant 0.000000e+00 : f32
      %13 = vector.broadcast %cst_11 : f32 to vector<16x128xf32>
      %c0_12 = arith.constant 0 : index
      %c0_13 = arith.constant 0 : index
      %14 = vector.load %arg8[%c0_12, %c0_13] : memref<16x128xf32, #tpu.memory_space<vmem>>, vector<16x128xf32>
      tpu.vector_store %arg8[%c0_12, %c0_13], %13 {strides = array<i32>} : memref<16x128xf32, #tpu.memory_space<vmem>>, vector<16x128xf32>,
    } else {
    }
    %c0 = arith.constant 0 : index
    %c0_1 = arith.constant 0 : index
    %3 = vector.load %arg4[%c0, %c0_1] : memref<16x128xbf16, #tpu.memory_space<vmem>>, vector<16x128xbf16>
    %c0_2 = arith.constant 0 : index
    %c0_3 = arith.constant 0 : index
    %c0_4 = arith.constant 0 : index
    %4 = vector.load %arg5[%c0_2, %c0_3, %c0_4] : memref<1x128x128xbf16, #tpu.memory_space<vmem>>, vector<1x128x128xbf16>
    %5 = vector.shape_cast %4 : vector<1x128x128xbf16> to vector<128x128xbf16>
    %c0_5 = arith.constant 0 : index
    %c0_6 = arith.constant 0 : index
    %6 = vector.load %arg8[%c0_5, %c0_6] : memref<16x128xf32, #tpu.memory_space<vmem>>, vector<16x128xf32>
    %cst = arith.constant dense<0.000000e+00> : vector<16x128xf32>
    %7 = tpu.matmul %3, %5, %cst {dimension_numbers = #tpu.dot_dimension_numbers<[1], [0], [0], [1], [0, 0, 1, 1], [], []>} : vector<16x128xbf16>, vector<128x128xbf16>, vector<16x128xf32> -> vector<16x128xf32>
    %8 = arith.addf %6, %7 : vector<16x128xf32>
    %c0_7 = arith.constant 0 : index
    %c0_8 = arith.constant 0 : index
    %9 = vector.load %arg8[%c0_7, %c0_8] : memref<16x128xf32, #tpu.memory_space<vmem>>, vector<16x128xf32>
    tpu.vector_store %arg8[%c0_7, %c0_8], %8 {strides = array<i32>} : memref<16x128xf32, #tpu.memory_space<vmem>>, vector<16x128xf32>,
    %c0_i32_9 = arith.constant 0 : i32
    %10 = arith.cmpi eq, %arg3, %c0_i32_9 : i32
    %11 = arith.extui %10 : i1 to i32
    %c0_i32_10 = arith.constant 0 : i32
    %12 = arith.cmpi ne, %11, %c0_i32_10 : i32
    scf.if %12 {
      %c0_11 = arith.constant 0 : index
      %c0_12 = arith.constant 0 : index
      %13 = vector.load %arg8[%c0_11, %c0_12] : memref<16x128xf32, #tpu.memory_space<vmem>>, vector<16x128xf32>
      %c0_13 = arith.constant 0 : index
      %c0_14 = arith.constant 0 : index
      %c0_15 = arith.constant 0 : index
      %14 = vector.load %arg6[%c0_13, %c0_14, %c0_15] : memref<1x1x128xf32, #tpu.memory_space<vmem>>, vector<1x1x128xf32>
      %15 = vector.shape_cast %14 : vector<1x1x128xf32> to vector<1x128xf32>
      %16 = vector.broadcast %15 : vector<1x128xf32> to vector<16x128xf32>
      %17 = arith.addf %13, %16 : vector<16x128xf32>
      %c0_16 = arith.constant 0 : index
      %c0_17 = arith.constant 0 : index
      %c0_18 = arith.constant 0 : index
      %18 = vector.load %arg7[%c0_16, %c0_17, %c0_18] : memref<1x16x128xf32, #tpu.memory_space<vmem>>, vector<1x16x128xf32>
      %19 = vector.shape_cast %18 : vector<1x16x128xf32> to vector<16x128xf32>
      %20 = vector.shape_cast %17 : vector<16x128xf32> to vector<1x16x128xf32>
      tpu.vector_store %arg7[%c0_16, %c0_17, %c0_18], %20 {strides = array<i32>} : memref<1x16x128xf32, #tpu.memory_space<vmem>>, vector<1x16x128xf32>,
    } else {
    }
    return
  }
  func.func @transform_0(%arg0: i32, %arg1: i32, %arg2: i32, %arg3: i32) -> (i32, i32) {
    %c0_i32 = arith.constant 0 : i32
    return %arg1, %arg3 : i32, i32
  }
  func.func @transform_1(%arg0: i32, %arg1: i32, %arg2: i32, %arg3: i32) -> (i32, i32, i32) {
    %c0_i32 = arith.constant 0 : i32
    %0 = arith.addi %c0_i32, %arg0 : i32
    %c0_i32_0 = arith.constant 0 : i32
    return %0, %arg3, %arg2 : i32, i32, i32
  }
  func.func @transform_2(%arg0: i32, %arg1: i32, %arg2: i32, %arg3: i32) -> (i32, i32, i32) {
    %c0_i32 = arith.constant 0 : i32
    %0 = arith.addi %c0_i32, %arg0 : i32
    %c0_i32_0 = arith.constant 0 : i32
    %c0_i32_1 = arith.constant 0 : i32
    return %0, %c0_i32_0, %arg2 : i32, i32, i32
  }
  func.func @transform_3(%arg0: i32, %arg1: i32, %arg2: i32, %arg3: i32) -> (i32, i32, i32) {
    %c0_i32 = arith.constant 0 : i32
    return %arg0, %arg1, %arg2 : i32, i32, i32
  }
}

</mosaic_0001>

<llo_original>
// kernel: multi_headed_attention.7
$region0: #{multi_headed_attention.7}
  #allocation0 [shape = 'u32[]', space=smem, size = 0x4, offset = 0x4, fixed_abs, tag = 'smem constant byte address 0x4 - core index']
  #allocation1 [shape = 'u32[144,128]{1,0:T(1,128)}', space=vmem, size = 0x12000, scoped, tag = 'internal scratch']
  #allocation2 [shape = 'f32[16,128]{1,0:T(8,128)}', space=vmem, size = 0x2000, scoped, tag = 'scratch operand']
  %s0 = inlined_call_operand.vmem [shape: f32[16,128], index: 0, kind: input, shape index: {}]
  %s1 = inlined_call_operand.vmem [shape: bf16[3,128,128], index: 1, kind: input, shape index: {}]
  %s2 = inlined_call_operand.vmem [shape: f32[3,1,128], index: 2, kind: input, shape index: {}]
  %s3 = inlined_call_operand.vmem [shape: bf16[1,16,128], index: 3, kind: output, shape index: {}]
  %s4 = sld [smem:[#allocation0]]
  $region30: #{multi_headed_attention.7} parent=0
    _
  %s6 = ssub.s32 1, %s4
  %s7 = scalar_select 0, %s6, %s4
  // Predicated region
  $region2: #{multi_headed_attention.7} parent=0 // pred_check
    _
  $region3: #{multi_headed_attention.7} parent=0 // pred_check_branch
    %9 = sbr.rel (0) target = $region5
  $region4: #{multi_headed_attention.7} parent=0 // pred_region
    _
  $region5: #{multi_headed_attention.7} parent=0 // pred_fallthru
    _
  // Predicated region
  $region6: #{multi_headed_attention.7} parent=0 // pred_check
    _
  $region7: #{multi_headed_attention.7} parent=0 // pred_check_branch
    %11 = sbr.rel (0) target = $region9
  $region8: #{multi_headed_attention.7} parent=0 // pred_region
    %s12 = sadd.s32 0, 2
    %p13 = scmp.lt.s32.totalorder %s12, 2
    %s14 = scalar_select %p13, %s12, 2
    %s15 = smul.addr %s14, 16
    %s16 = smul.addr %s15, 4
    %s17 = scalar_lea.vmem %s1, %s16
    %s18 = sadd.s32 0, 2
  $region9: #{multi_headed_attention.7} parent=0 // pred_fallthru
    _
  // Predicated region
  $region10: #{multi_headed_attention.7} parent=0 // pred_check
    _
  $region11: #{multi_headed_attention.7} parent=0 // pred_check_branch
    %20 = sbr.rel (0) target = $region13
  $region12: #{multi_headed_attention.7} parent=0 // pred_region
    %s21 = sadd.s32 0, 2
    %p22 = scmp.lt.s32.totalorder %s21, 2
    %s23 = scalar_select %p22, %s21, 2
    %s24 = scalar_lea.vmem %s2, %s23
    %s25 = sadd.s32 0, 2
  $region13: #{multi_headed_attention.7} parent=0 // pred_fallthru
    _
  %s26 = sadd.s32 0, 2
  %p27 = scmp.lt.s32.totalorder %s26, 2
  %s28 = scalar_select %p27, %s26, 2
  %s29 = smul.addr %s28, 16
  %s30 = smul.addr %s29, 4
  %s31 = scalar_lea.vmem %s1, %s30
  %s32 = sadd.s32 0, 2
  %p33 = scmp.lt.s32.totalorder %s32, 2
  %s34 = scalar_select %p33, %s32, 2
  %s35 = scalar_lea.vmem %s2, %s34
  %s36 = sadd.s32 0, 2
  %p37 = scmp.lt.s32.totalorder %s36, 2
  %s38 = scalar_select %p37, %s36, 2
  %s39 = smul.addr %s38, 16
  %s40 = smul.addr %s39, 4
  %s41 = scalar_lea.vmem %s1, %s40
  %s42 = sadd.s32 0, 2
  %s43 = sadd.s32 0, 2
  %p44 = scmp.lt.s32.totalorder %s43, 2
  %s45 = scalar_select %p44, %s43, 2
  %s46 = scalar_lea.vmem %s2, %s45
  %s47 = sadd.s32 0, 2
  %p49 = scmp.eq.s32.totalorder 0, 0
  // Predicated region
  $region14: #{multi_headed_attention.7} parent=0 // pred_check
    %p50 = pneg %p49
  $region15: #{multi_headed_attention.7} parent=0 // pred_check_branch
    %52 = sbr.rel (%p50) target = $region17
  $region16: #{multi_headed_attention.7} parent=0 // pred_region
    %53 = vst [vmem:[#allocation2] sm:$0xff] 0.0
    %54 = vst [vmem:[#allocation2 + $0x8] sm:$0xff] 0.0
  $region17: #{multi_headed_attention.7} parent=0 // pred_fallthru
    _
  %v55 = vld [vmem:[%s0] sm:$0xff]
  %v56 = vld [vmem:[%s0 + $0x8] sm:$0xff]
  %v57 = vpack.c.bf16 %v56, %v55
  %v58 = vld [vmem:[%s41] sm:$0xf]
  %v59 = vld [vmem:[%s41 + $0x4] sm:$0xf]
  %v60 = vld [vmem:[%s41 + $0x8] sm:$0xf]
  %v61 = vld [vmem:[%s41 + $0xc] sm:$0xf]
  %v62 = vld [vmem:[%s41 + $0x10] sm:$0xf]
  %v63 = vld [vmem:[%s41 + $0x14] sm:$0xf]
  %v64 = vld [vmem:[%s41 + $0x18] sm:$0xf]
  %v65 = vld [vmem:[%s41 + $0x1c] sm:$0xf]
  %v66 = vld [vmem:[%s41 + $0x20] sm:$0xf]
  %v67 = vld [vmem:[%s41 + $0x24] sm:$0xf]
  %v68 = vld [vmem:[%s41 + $0x28] sm:$0xf]
  %v69 = vld [vmem:[%s41 + $0x2c] sm:$0xf]
  %v70 = vld [vmem:[%s41 + $0x30] sm:$0xf]
  %v71 = vld [vmem:[%s41 + $0x34] sm:$0xf]
  %v72 = vld [vmem:[%s41 + $0x38] sm:$0xf]
  %v73 = vld [vmem:[%s41 + $0x3c] sm:$0xf]
  %v74 = vld [vmem:[#allocation2] sm:$0xff]
  %v75 = vld [vmem:[#allocation2 + $0x8] sm:$0xff]
  %v92 = vunpack.c.l.b16 %v58
  %v93 = vunpack.c.l.b16 %v59
  %v94 = vunpack.c.l.b16 %v60
  %v95 = vunpack.c.l.b16 %v61
  %v96 = vunpack.c.l.b16 %v62
  %v97 = vunpack.c.l.b16 %v63
  %v98 = vunpack.c.l.b16 %v64
  %v99 = vunpack.c.l.b16 %v65
  %v100 = vunpack.c.l.b16 %v66
  %v101 = vunpack.c.l.b16 %v67
  %v102 = vunpack.c.l.b16 %v68
  %v103 = vunpack.c.l.b16 %v69
  %v104 = vunpack.c.l.b16 %v70
  %v105 = vunpack.c.l.b16 %v71
  %v106 = vunpack.c.l.b16 %v72
  %v107 = vunpack.c.l.b16 %v73
  %v108 = vpack.c.b16 %v93, %v92
  %v109 = vpack.c.b16 %v95, %v94
  %v110 = vpack.c.b16 %v97, %v96
  %v111 = vpack.c.b16 %v99, %v98
  %v112 = vpack.c.b16 %v101, %v100
  %v113 = vpack.c.b16 %v103, %v102
  %v114 = vpack.c.b16 %v105, %v104
  %v115 = vpack.c.b16 %v107, %v106
  %124 = vmatprep.subr.bf16.mxu0 0
  %125 = vmatpush1.bf16.msra.mxu0 %v108
  %126 = vmatprep.subr.bf16.mxu0 0
  %127 = vmatpush1.bf16.msra.mxu0 %v109
  %128 = vmatprep.subr.bf16.mxu0 0
  %129 = vmatpush1.bf16.msra.mxu0 %v110
  %130 = vmatprep.subr.bf16.mxu0 0
  %131 = vmatpush1.bf16.msra.mxu0 %v111
  %132 = vmatprep.subr.bf16.mxu0 0
  %133 = vmatpush1.bf16.msra.mxu0 %v112
  %134 = vmatprep.subr.bf16.mxu0 0
  %135 = vmatpush1.bf16.msra.mxu0 %v113
  %136 = vmatprep.subr.bf16.mxu0 0
  %137 = vmatpush1.bf16.msra.mxu0 %v114
  %138 = vmatprep.subr.bf16.mxu0 0
  %139 = vmatpush1.bf16.msra.mxu0 %v115
  %140 = vmatprep.subr.bf16.mxu0 0
  %141 = vmatpush1.bf16.msra.mxu0 0
  %142 = vmatprep.subr.bf16.mxu0 0
  %143 = vmatpush1.bf16.msra.mxu0 0
  %144 = vmatprep.subr.bf16.mxu0 0
  %145 = vmatpush1.bf16.msra.mxu0 0
  %146 = vmatprep.subr.bf16.mxu0 0
  %147 = vmatpush1.bf16.msra.mxu0 0
  %148 = vmatprep.subr.bf16.mxu0 0
  %149 = vmatpush1.bf16.msra.mxu0 0
  %150 = vmatprep.subr.bf16.mxu0 0
  %151 = vmatpush1.bf16.msra.mxu0 0
  %152 = vmatprep.subr.bf16.mxu0 0
  %153 = vmatpush1.bf16.msra.mxu0 0
  %154 = vmatprep.subr.bf16.mxu0 0
  %155 = vmatpush1.bf16.msra.mxu0 0
  %156 = vmatprep.mubr.bf16.mxu0 0
  %157 = vmatmul.mubr.bf16.gmra.mrb[0].mxu0 %v57
  %v158 = vpop.f32.mrb[0].mxu0
  %v159 = vadd.f32 0.0, %v158
  %v160 = vpop.f32.mrb[0].mxu0
  %v161 = vpop.f32.mrb[0].mxu0
  %v162 = vadd.f32 0.0, %v161
  %v163 = vpop.f32.mrb[0].mxu0
  %164 = vdwg.mxu0
  %v165 = vadd.f32 %v74, %v159
  %v166 = vadd.f32 %v75, %v162
  %167 = vst [vmem:[#allocation2] sm:$0xff] %v165
  %168 = vst [vmem:[#allocation2 + $0x8] sm:$0xff] %v166
  // Predicated region
  $region18: #{multi_headed_attention.7} parent=0 // pred_check
    %p169 = pneg %p49
  $region19: #{multi_headed_attention.7} parent=0 // pred_check_branch
    %171 = sbr.rel (%p169) target = $region21
  $region20: #{multi_headed_attention.7} parent=0 // pred_region
    %v172 = vld [vmem:[#allocation2] sm:$0xff]
    %v173 = vld [vmem:[#allocation2 + $0x8] sm:$0xff]
    %v174 = vld [vmem:[%s46] sm:$0x1]
    %v176 = vlaneseq
    %v177 = vshrl.u32 %v176, 7
    %v178 = vsub.s32 0, %v177
    %v179 = vrot.slane %v174, %v178
    %v181 = vadd.f32 %v172, %v179
    %v182 = vadd.f32 %v173, %v179
    %v183 = vpack.c.bf16 %v182, %v181
    %v185 = vunpack.c.l.b16 %v183
    %v186 = vunpack.c.h.b16 %v183
    %v187 = vpack.c.b16 %v185, %v185
    %v188 = vpack.c.b16 %v186, %v186
    %191 = vst [vmem:[%s3] sm:$0xf] %v187
    %192 = vst [vmem:[%s3 + $0x4] sm:$0xf] %v188
  $region21: #{multi_headed_attention.7} parent=0 // pred_fallthru
    _
  // Predicated region
  $region22: #{multi_headed_attention.7} parent=0 // pred_check
    _
  $region23: #{multi_headed_attention.7} parent=0 // pred_check_branch
    %194 = sbr.rel (0) target = $region25
  $region24: #{multi_headed_attention.7} parent=0 // pred_region
    _
  $region25: #{multi_headed_attention.7} parent=0 // pred_fallthru
    _
  // Predicated region
  $region26: #{multi_headed_attention.7} parent=0 // pred_check
    _
  $region27: #{multi_headed_attention.7} parent=0 // pred_check_branch
    %196 = sbr.rel (0) target = $region29
  $region28: #{multi_headed_attention.7} parent=0 // pred_region
    _
  $region29: #{multi_headed_attention.7} parent=0 // pred_fallthru
    _

// kernel: multi_headed_attention.6
$region0: #{multi_headed_attention.6}
  #allocation0 [shape = 'u32[]', space=smem, size = 0x4, offset = 0x4, fixed_abs, tag = 'smem constant byte address 0x4 - core index']
  #allocation1 [shape = 'u32[144,128]{1,0:T(1,128)}', space=vmem, size = 0x12000, scoped, tag = 'internal scratch']
  #allocation2 [shape = 'f32[16,128]{1,0:T(8,128)}', space=vmem, size = 0x2000, scoped, tag = 'scratch operand']
  %s0 = inlined_call_operand.vmem [shape: f32[16,128], index: 0, kind: input, shape index: {}]
  %s1 = inlined_call_operand.vmem [shape: bf16[3,128,128], index: 1, kind: input, shape index: {}]
  %s2 = inlined_call_operand.vmem [shape: f32[3,1,128], index: 2, kind: input, shape index: {}]
  %s3 = inlined_call_operand.vmem [shape: bf16[1,16,128], index: 3, kind: output, shape index: {}]
  %s4 = sld [smem:[#allocation0]]
  $region30: #{multi_headed_attention.6} parent=0
    _
  %s6 = ssub.s32 1, %s4
  %s7 = scalar_select 0, %s6, %s4
  // Predicated region
  $region2: #{multi_headed_attention.6} parent=0 // pred_check
    _
  $region3: #{multi_headed_attention.6} parent=0 // pred_check_branch
    %9 = sbr.rel (0) target = $region5
  $region4: #{multi_headed_attention.6} parent=0 // pred_region
    _
  $region5: #{multi_headed_attention.6} parent=0 // pred_fallthru
    _
  // Predicated region
  $region6: #{multi_headed_attention.6} parent=0 // pred_check
    _
  $region7: #{multi_headed_attention.6} parent=0 // pred_check_branch
    %11 = sbr.rel (0) target = $region9
  $region8: #{multi_headed_attention.6} parent=0 // pred_region
    %s12 = sadd.s32 0, 1
    %p13 = scmp.lt.s32.totalorder %s12, 2
    %s14 = scalar_select %p13, %s12, 2
    %s15 = smul.addr %s14, 16
    %s16 = smul.addr %s15, 4
    %s17 = scalar_lea.vmem %s1, %s16
    %s18 = sadd.s32 0, 1
  $region9: #{multi_headed_attention.6} parent=0 // pred_fallthru
    _
  // Predicated region
  $region10: #{multi_headed_attention.6} parent=0 // pred_check
    _
  $region11: #{multi_headed_attention.6} parent=0 // pred_check_branch
    %20 = sbr.rel (0) target = $region13
  $region12: #{multi_headed_attention.6} parent=0 // pred_region
    %s21 = sadd.s32 0, 1
    %p22 = scmp.lt.s32.totalorder %s21, 2
    %s23 = scalar_select %p22, %s21, 2
    %s24 = scalar_lea.vmem %s2, %s23
    %s25 = sadd.s32 0, 1
  $region13: #{multi_headed_attention.6} parent=0 // pred_fallthru
    _
  %s26 = sadd.s32 0, 1
  %p27 = scmp.lt.s32.totalorder %s26, 2
  %s28 = scalar_select %p27, %s26, 2
  %s29 = smul.addr %s28, 16
  %s30 = smul.addr %s29, 4
  %s31 = scalar_lea.vmem %s1, %s30
  %s32 = sadd.s32 0, 1
  %p33 = scmp.lt.s32.totalorder %s32, 2
  %s34 = scalar_select %p33, %s32, 2
  %s35 = scalar_lea.vmem %s2, %s34
  %s36 = sadd.s32 0, 1
  %p37 = scmp.lt.s32.totalorder %s36, 2
  %s38 = scalar_select %p37, %s36, 2
  %s39 = smul.addr %s38, 16
  %s40 = smul.addr %s39, 4
  %s41 = scalar_lea.vmem %s1, %s40
  %s42 = sadd.s32 0, 1
  %s43 = sadd.s32 0, 1
  %p44 = scmp.lt.s32.totalorder %s43, 2
  %s45 = scalar_select %p44, %s43, 2
  %s46 = scalar_lea.vmem %s2, %s45
  %s47 = sadd.s32 0, 1
  %p49 = scmp.eq.s32.totalorder 0, 0
  // Predicated region
  $region14: #{multi_headed_attention.6} parent=0 // pred_check
    %p50 = pneg %p49
  $region15: #{multi_headed_attention.6} parent=0 // pred_check_branch
    %52 = sbr.rel (%p50) target = $region17
  $region16: #{multi_headed_attention.6} parent=0 // pred_region
    %53 = vst [vmem:[#allocation2] sm:$0xff] 0.0
    %54 = vst [vmem:[#allocation2 + $0x8] sm:$0xff] 0.0
  $region17: #{multi_headed_attention.6} parent=0 // pred_fallthru
    _
  %v55 = vld [vmem:[%s0] sm:$0xff]
  %v56 = vld [vmem:[%s0 + $0x8] sm:$0xff]
  %v57 = vpack.c.bf16 %v56, %v55
  %v58 = vld [vmem:[%s41] sm:$0xf]
  %v59 = vld [vmem:[%s41 + $0x4] sm:$0xf]
  %v60 = vld [vmem:[%s41 + $0x8] sm:$0xf]
  %v61 = vld [vmem:[%s41 + $0xc] sm:$0xf]
  %v62 = vld [vmem:[%s41 + $0x10] sm:$0xf]
  %v63 = vld [vmem:[%s41 + $0x14] sm:$0xf]
  %v64 = vld [vmem:[%s41 + $0x18] sm:$0xf]
  %v65 = vld [vmem:[%s41 + $0x1c] sm:$0xf]
  %v66 = vld [vmem:[%s41 + $0x20] sm:$0xf]
  %v67 = vld [vmem:[%s41 + $0x24] sm:$0xf]
  %v68 = vld [vmem:[%s41 + $0x28] sm:$0xf]
  %v69 = vld [vmem:[%s41 + $0x2c] sm:$0xf]
  %v70 = vld [vmem:[%s41 + $0x30] sm:$0xf]
  %v71 = vld [vmem:[%s41 + $0x34] sm:$0xf]
  %v72 = vld [vmem:[%s41 + $0x38] sm:$0xf]
  %v73 = vld [vmem:[%s41 + $0x3c] sm:$0xf]
  %v74 = vld [vmem:[#allocation2] sm:$0xff]
  %v75 = vld [vmem:[#allocation2 + $0x8] sm:$0xff]
  %v92 = vunpack.c.l.b16 %v58
  %v93 = vunpack.c.l.b16 %v59
  %v94 = vunpack.c.l.b16 %v60
  %v95 = vunpack.c.l.b16 %v61
  %v96 = vunpack.c.l.b16 %v62
  %v97 = vunpack.c.l.b16 %v63
  %v98 = vunpack.c.l.b16 %v64
  %v99 = vunpack.c.l.b16 %v65
  %v100 = vunpack.c.l.b16 %v66
  %v101 = vunpack.c.l.b16 %v67
  %v102 = vunpack.c.l.b16 %v68
  %v103 = vunpack.c.l.b16 %v69
  %v104 = vunpack.c.l.b16 %v70
  %v105 = vunpack.c.l.b16 %v71
  %v106 = vunpack.c.l.b16 %v72
  %v107 = vunpack.c.l.b16 %v73
  %v108 = vpack.c.b16 %v93, %v92
  %v109 = vpack.c.b16 %v95, %v94
  %v110 = vpack.c.b16 %v97, %v96
  %v111 = vpack.c.b16 %v99, %v98
  %v112 = vpack.c.b16 %v101, %v100
  %v113 = vpack.c.b16 %v103, %v102
  %v114 = vpack.c.b16 %v105, %v104
  %v115 = vpack.c.b16 %v107, %v106
  %124 = vmatprep.subr.bf16.mxu0 0
  %125 = vmatpush1.bf16.msra.mxu0 %v108
  %126 = vmatprep.subr.bf16.mxu0 0
  %127 = vmatpush1.bf16.msra.mxu0 %v109
  %128 = vmatprep.subr.bf16.mxu0 0
  %129 = vmatpush1.bf16.msra.mxu0 %v110
  %130 = vmatprep.subr.bf16.mxu0 0
  %131 = vmatpush1.bf16.msra.mxu0 %v111
  %132 = vmatprep.subr.bf16.mxu0 0
  %133 = vmatpush1.bf16.msra.mxu0 %v112
  %134 = vmatprep.subr.bf16.mxu0 0
  %135 = vmatpush1.bf16.msra.mxu0 %v113
  %136 = vmatprep.subr.bf16.mxu0 0
  %137 = vmatpush1.bf16.msra.mxu0 %v114
  %138 = vmatprep.subr.bf16.mxu0 0
  %139 = vmatpush1.bf16.msra.mxu0 %v115
  %140 = vmatprep.subr.bf16.mxu0 0
  %141 = vmatpush1.bf16.msra.mxu0 0
  %142 = vmatprep.subr.bf16.mxu0 0
  %143 = vmatpush1.bf16.msra.mxu0 0
  %144 = vmatprep.subr.bf16.mxu0 0
  %145 = vmatpush1.bf16.msra.mxu0 0
  %146 = vmatprep.subr.bf16.mxu0 0
  %147 = vmatpush1.bf16.msra.mxu0 0
  %148 = vmatprep.subr.bf16.mxu0 0
  %149 = vmatpush1.bf16.msra.mxu0 0
  %150 = vmatprep.subr.bf16.mxu0 0
  %151 = vmatpush1.bf16.msra.mxu0 0
  %152 = vmatprep.subr.bf16.mxu0 0
  %153 = vmatpush1.bf16.msra.mxu0 0
  %154 = vmatprep.subr.bf16.mxu0 0
  %155 = vmatpush1.bf16.msra.mxu0 0
  %156 = vmatprep.mubr.bf16.mxu0 0
  %157 = vmatmul.mubr.bf16.gmra.mrb[0].mxu0 %v57
  %v158 = vpop.f32.mrb[0].mxu0
  %v159 = vadd.f32 0.0, %v158
  %v160 = vpop.f32.mrb[0].mxu0
  %v161 = vpop.f32.mrb[0].mxu0
  %v162 = vadd.f32 0.0, %v161
  %v163 = vpop.f32.mrb[0].mxu0
  %164 = vdwg.mxu0
  %v165 = vadd.f32 %v74, %v159
  %v166 = vadd.f32 %v75, %v162
  %167 = vst [vmem:[#allocation2] sm:$0xff] %v165
  %168 = vst [vmem:[#allocation2 + $0x8] sm:$0xff] %v166
  // Predicated region
  $region18: #{multi_headed_attention.6} parent=0 // pred_check
    %p169 = pneg %p49
  $region19: #{multi_headed_attention.6} parent=0 // pred_check_branch
    %171 = sbr.rel (%p169) target = $region21
  $region20: #{multi_headed_attention.6} parent=0 // pred_region
    %v172 = vld [vmem:[#allocation2] sm:$0xff]
    %v173 = vld [vmem:[#allocation2 + $0x8] sm:$0xff]
    %v174 = vld [vmem:[%s46] sm:$0x1]
    %v176 = vlaneseq
    %v177 = vshrl.u32 %v176, 7
    %v178 = vsub.s32 0, %v177
    %v179 = vrot.slane %v174, %v178
    %v181 = vadd.f32 %v172, %v179
    %v182 = vadd.f32 %v173, %v179
    %v183 = vpack.c.bf16 %v182, %v181
    %v185 = vunpack.c.l.b16 %v183
    %v186 = vunpack.c.h.b16 %v183
    %v187 = vpack.c.b16 %v185, %v185
    %v188 = vpack.c.b16 %v186, %v186
    %191 = vst [vmem:[%s3] sm:$0xf] %v187
    %192 = vst [vmem:[%s3 + $0x4] sm:$0xf] %v188
  $region21: #{multi_headed_attention.6} parent=0 // pred_fallthru
    _
  // Predicated region
  $region22: #{multi_headed_attention.6} parent=0 // pred_check
    _
  $region23: #{multi_headed_attention.6} parent=0 // pred_check_branch
    %194 = sbr.rel (0) target = $region25
  $region24: #{multi_headed_attention.6} parent=0 // pred_region
    _
  $region25: #{multi_headed_attention.6} parent=0 // pred_fallthru
    _
  // Predicated region
  $region26: #{multi_headed_attention.6} parent=0 // pred_check
    _
  $region27: #{multi_headed_attention.6} parent=0 // pred_check_branch
    %196 = sbr.rel (0) target = $region29
  $region28: #{multi_headed_attention.6} parent=0 // pred_region
    _
  $region29: #{multi_headed_attention.6} parent=0 // pred_fallthru
    _

// kernel: multi_headed_attention.5
$region0: #{multi_headed_attention.5}
  #allocation0 [shape = 'u32[]', space=smem, size = 0x4, offset = 0x4, fixed_abs, tag = 'smem constant byte address 0x4 - core index']
  #allocation1 [shape = 'u32[144,128]{1,0:T(1,128)}', space=vmem, size = 0x12000, scoped, tag = 'internal scratch']
  #allocation2 [shape = 'f32[16,128]{1,0:T(8,128)}', space=vmem, size = 0x2000, scoped, tag = 'scratch operand']
  %s0 = inlined_call_operand.vmem [shape: f32[16,128], index: 0, kind: input, shape index: {}]
  %s1 = inlined_call_operand.vmem [shape: bf16[3,128,128], index: 1, kind: input, shape index: {}]
  %s2 = inlined_call_operand.vmem [shape: f32[3,1,128], index: 2, kind: input, shape index: {}]
  %s3 = inlined_call_operand.vmem [shape: bf16[1,16,128], index: 3, kind: output, shape index: {}]
  %s4 = sld [smem:[#allocation0]]
  $region30: #{multi_headed_attention.5} parent=0
    _
  %s6 = ssub.s32 1, %s4
  %s7 = scalar_select 0, %s6, %s4
  // Predicated region
  $region2: #{multi_headed_attention.5} parent=0 // pred_check
    _
  $region3: #{multi_headed_attention.5} parent=0 // pred_check_branch
    %9 = sbr.rel (0) target = $region5
  $region4: #{multi_headed_attention.5} parent=0 // pred_region
    _
  $region5: #{multi_headed_attention.5} parent=0 // pred_fallthru
    _
  // Predicated region
  $region6: #{multi_headed_attention.5} parent=0 // pred_check
    _
  $region7: #{multi_headed_attention.5} parent=0 // pred_check_branch
    %11 = sbr.rel (0) target = $region9
  $region8: #{multi_headed_attention.5} parent=0 // pred_region
    _
  $region9: #{multi_headed_attention.5} parent=0 // pred_fallthru
    _
  // Predicated region
  $region10: #{multi_headed_attention.5} parent=0 // pred_check
    _
  $region11: #{multi_headed_attention.5} parent=0 // pred_check_branch
    %13 = sbr.rel (0) target = $region13
  $region12: #{multi_headed_attention.5} parent=0 // pred_region
    _
  $region13: #{multi_headed_attention.5} parent=0 // pred_fallthru
    _
  %p15 = scmp.eq.s32.totalorder 0, 0
  // Predicated region
  $region14: #{multi_headed_attention.5} parent=0 // pred_check
    %p16 = pneg %p15
  $region15: #{multi_headed_attention.5} parent=0 // pred_check_branch
    %18 = sbr.rel (%p16) target = $region17
  $region16: #{multi_headed_attention.5} parent=0 // pred_region
    %19 = vst [vmem:[#allocation2] sm:$0xff] 0.0
    %20 = vst [vmem:[#allocation2 + $0x8] sm:$0xff] 0.0
  $region17: #{multi_headed_attention.5} parent=0 // pred_fallthru
    _
  %v21 = vld [vmem:[%s0] sm:$0xff]
  %v22 = vld [vmem:[%s0 + $0x8] sm:$0xff]
  %v23 = vpack.c.bf16 %v22, %v21
  %v24 = vld [vmem:[%s1] sm:$0xf]
  %v25 = vld [vmem:[%s1 + $0x4] sm:$0xf]
  %v26 = vld [vmem:[%s1 + $0x8] sm:$0xf]
  %v27 = vld [vmem:[%s1 + $0xc] sm:$0xf]
  %v28 = vld [vmem:[%s1 + $0x10] sm:$0xf]
  %v29 = vld [vmem:[%s1 + $0x14] sm:$0xf]
  %v30 = vld [vmem:[%s1 + $0x18] sm:$0xf]
  %v31 = vld [vmem:[%s1 + $0x1c] sm:$0xf]
  %v32 = vld [vmem:[%s1 + $0x20] sm:$0xf]
  %v33 = vld [vmem:[%s1 + $0x24] sm:$0xf]
  %v34 = vld [vmem:[%s1 + $0x28] sm:$0xf]
  %v35 = vld [vmem:[%s1 + $0x2c] sm:$0xf]
  %v36 = vld [vmem:[%s1 + $0x30] sm:$0xf]
  %v37 = vld [vmem:[%s1 + $0x34] sm:$0xf]
  %v38 = vld [vmem:[%s1 + $0x38] sm:$0xf]
  %v39 = vld [vmem:[%s1 + $0x3c] sm:$0xf]
  %v40 = vld [vmem:[#allocation2] sm:$0xff]
  %v41 = vld [vmem:[#allocation2 + $0x8] sm:$0xff]
  %v58 = vunpack.c.l.b16 %v24
  %v59 = vunpack.c.l.b16 %v25
  %v60 = vunpack.c.l.b16 %v26
  %v61 = vunpack.c.l.b16 %v27
  %v62 = vunpack.c.l.b16 %v28
  %v63 = vunpack.c.l.b16 %v29
  %v64 = vunpack.c.l.b16 %v30
  %v65 = vunpack.c.l.b16 %v31
  %v66 = vunpack.c.l.b16 %v32
  %v67 = vunpack.c.l.b16 %v33
  %v68 = vunpack.c.l.b16 %v34
  %v69 = vunpack.c.l.b16 %v35
  %v70 = vunpack.c.l.b16 %v36
  %v71 = vunpack.c.l.b16 %v37
  %v72 = vunpack.c.l.b16 %v38
  %v73 = vunpack.c.l.b16 %v39
  %v74 = vpack.c.b16 %v59, %v58
  %v75 = vpack.c.b16 %v61, %v60
  %v76 = vpack.c.b16 %v63, %v62
  %v77 = vpack.c.b16 %v65, %v64
  %v78 = vpack.c.b16 %v67, %v66
  %v79 = vpack.c.b16 %v69, %v68
  %v80 = vpack.c.b16 %v71, %v70
  %v81 = vpack.c.b16 %v73, %v72
  %90 = vmatprep.subr.bf16.mxu0 0
  %91 = vmatpush1.bf16.msra.mxu0 %v74
  %92 = vmatprep.subr.bf16.mxu0 0
  %93 = vmatpush1.bf16.msra.mxu0 %v75
  %94 = vmatprep.subr.bf16.mxu0 0
  %95 = vmatpush1.bf16.msra.mxu0 %v76
  %96 = vmatprep.subr.bf16.mxu0 0
  %97 = vmatpush1.bf16.msra.mxu0 %v77
  %98 = vmatprep.subr.bf16.mxu0 0
  %99 = vmatpush1.bf16.msra.mxu0 %v78
  %100 = vmatprep.subr.bf16.mxu0 0
  %101 = vmatpush1.bf16.msra.mxu0 %v79
  %102 = vmatprep.subr.bf16.mxu0 0
  %103 = vmatpush1.bf16.msra.mxu0 %v80
  %104 = vmatprep.subr.bf16.mxu0 0
  %105 = vmatpush1.bf16.msra.mxu0 %v81
  %106 = vmatprep.subr.bf16.mxu0 0
  %107 = vmatpush1.bf16.msra.mxu0 0
  %108 = vmatprep.subr.bf16.mxu0 0
  %109 = vmatpush1.bf16.msra.mxu0 0
  %110 = vmatprep.subr.bf16.mxu0 0
  %111 = vmatpush1.bf16.msra.mxu0 0
  %112 = vmatprep.subr.bf16.mxu0 0
  %113 = vmatpush1.bf16.msra.mxu0 0
  %114 = vmatprep.subr.bf16.mxu0 0
  %115 = vmatpush1.bf16.msra.mxu0 0
  %116 = vmatprep.subr.bf16.mxu0 0
  %117 = vmatpush1.bf16.msra.mxu0 0
  %118 = vmatprep.subr.bf16.mxu0 0
  %119 = vmatpush1.bf16.msra.mxu0 0
  %120 = vmatprep.subr.bf16.mxu0 0
  %121 = vmatpush1.bf16.msra.mxu0 0
  %122 = vmatprep.mubr.bf16.mxu0 0
  %123 = vmatmul.mubr.bf16.gmra.mrb[0].mxu0 %v23
  %v124 = vpop.f32.mrb[0].mxu0
  %v125 = vadd.f32 0.0, %v124
  %v126 = vpop.f32.mrb[0].mxu0
  %v127 = vpop.f32.mrb[0].mxu0
  %v128 = vadd.f32 0.0, %v127
  %v129 = vpop.f32.mrb[0].mxu0
  %130 = vdwg.mxu0
  %v131 = vadd.f32 %v40, %v125
  %v132 = vadd.f32 %v41, %v128
  %133 = vst [vmem:[#allocation2] sm:$0xff] %v131
  %134 = vst [vmem:[#allocation2 + $0x8] sm:$0xff] %v132
  // Predicated region
  $region18: #{multi_headed_attention.5} parent=0 // pred_check
    %p135 = pneg %p15
  $region19: #{multi_headed_attention.5} parent=0 // pred_check_branch
    %137 = sbr.rel (%p135) target = $region21
  $region20: #{multi_headed_attention.5} parent=0 // pred_region
    %v138 = vld [vmem:[#allocation2] sm:$0xff]
    %v139 = vld [vmem:[#allocation2 + $0x8] sm:$0xff]
    %v140 = vld [vmem:[%s2] sm:$0x1]
    %v142 = vlaneseq
    %v143 = vshrl.u32 %v142, 7
    %v144 = vsub.s32 0, %v143
    %v145 = vrot.slane %v140, %v144
    %v147 = vadd.f32 %v138, %v145
    %v148 = vadd.f32 %v139, %v145
    %v149 = vpack.c.bf16 %v148, %v147
    %v151 = vunpack.c.l.b16 %v149
    %v152 = vunpack.c.h.b16 %v149
    %v153 = vpack.c.b16 %v151, %v151
    %v154 = vpack.c.b16 %v152, %v152
    %157 = vst [vmem:[%s3] sm:$0xf] %v153
    %158 = vst [vmem:[%s3 + $0x4] sm:$0xf] %v154
  $region21: #{multi_headed_attention.5} parent=0 // pred_fallthru
    _
  // Predicated region
  $region22: #{multi_headed_attention.5} parent=0 // pred_check
    _
  $region23: #{multi_headed_attention.5} parent=0 // pred_check_branch
    %160 = sbr.rel (0) target = $region25
  $region24: #{multi_headed_attention.5} parent=0 // pred_region
    _
  $region25: #{multi_headed_attention.5} parent=0 // pred_fallthru
    _
  // Predicated region
  $region26: #{multi_headed_attention.5} parent=0 // pred_check
    _
  $region27: #{multi_headed_attention.5} parent=0 // pred_check_branch
    %162 = sbr.rel (0) target = $region29
  $region28: #{multi_headed_attention.5} parent=0 // pred_region
    _
  $region29: #{multi_headed_attention.5} parent=0 // pred_fallthru
    _

// kernel: multi_headed_attention.8
$region0: #{multi_headed_attention.8}
  #allocation0 [shape = 'u32[]', space=smem, size = 0x4, offset = 0x4, fixed_abs, tag = 'smem constant byte address 0x4 - core index']
  #allocation1 [shape = 'u32[144,128]{1,0:T(1,128)}', space=vmem, size = 0x12000, scoped, tag = 'internal scratch']
  #allocation2 [shape = 'f32[8,4]{1,0:T(8,128)}', space=vmem, size = 0x1000, scoped, tag = 'scratch operand']
  #allocation3 [shape = 'f32[8,4]{1,0:T(8,128)}', space=vmem, size = 0x1000, scoped, tag = 'scratch operand']
  #allocation4 [shape = 'f32[8,32]{1,0:T(8,128)}', space=vmem, size = 0x1000, scoped, tag = 'scratch operand']
  %s0 = inlined_call_operand.vmem [shape: bf16[1,2,8,32], index: 0, kind: input, shape index: {}]
  %s1 = inlined_call_operand.vmem [shape: bf16[1,2,8,32], index: 1, kind: input, shape index: {}]
  %s2 = inlined_call_operand.vmem [shape: bf16[1,2,8,32], index: 2, kind: input, shape index: {}]
  %s3 = inlined_call_operand.vmem [shape: bf16[2,8,32], index: 3, kind: output, shape index: {}]
  %s4 = sld [smem:[#allocation0]]
  $region53: #{multi_headed_attention.8} parent=0
    _
  %s6 = ssub.s32 1, %s4
  %s7 = scalar_select 0, %s6, %s4
  loop: start=0, step=1, limit=4
  $region2: #{multi_headed_attention.8} parent=0 // loop_pre_header
    _
  $region3: #{multi_headed_attention.8} parent=0 // loop_header
    %s9 = sphi 0, %s13
    %p10 = scmp.ge.s32.totalorder %s9, 4
    %s16 = sphi 0, %s35
    %s17 = sphi 0, %s31
    %s18 = sphi 0, %s27
    %s19 = sphi 0, %s16
    %s20 = sphi 0, %s17
    %s21 = sphi 0, %s18
    %s22 = sphi 0, %s19
    %s23 = sphi 0, %s20
    %s24 = sphi 0, %s21
    %s40 = sphi 0, %s42
    %s43 = sphi 0, %s40
    %s44 = sphi 0, %s43
    %s60 = sphi 0, %s44
    %s68 = sphi 0, %s70
    %s71 = sphi 0, %s68
    %s72 = sphi 0, %s71
    %s88 = sphi 0, %s72
    %s96 = sphi 0, %s98
    %s99 = sphi 0, %s96
    %s100 = sphi 0, %s99
    %s116 = sphi 0, %s100
    %s124 = sphi 0, %s126
    %s127 = sphi 0, %s124
    %s128 = sphi 0, %s127
    %s144 = sphi 0, %s128
  $region4: #{multi_headed_attention.8} parent=0 // loop_header_branch
    %12 = sbr.rel (%p10) target = $region8
  $region5: #{multi_headed_attention.8} parent=0 // loop_body
    %s14 = ssub.s32 %s9, 1
    %s15 = ssub.s32 %s9, 2
    %s25 = sadd.s32 1, %s18
    %p26 = scmp.ge.s32.totalorder %s25, 1
    %s27 = scalar_select %p26, 0, %s25
    %s28 = sadd.s32 1, %s17
    %s29 = scalar_select %p26, %s28, %s17
    %p30 = scmp.ge.s32.totalorder %s29, 1
    %s31 = scalar_select %p30, 0, %s29
    %s32 = sadd.s32 1, %s16
    %s33 = scalar_select %p30, %s32, %s16
    %p34 = scmp.ge.s32.totalorder %s33, 2
    %s35 = scalar_select %p34, 0, %s33
    %s36 = ssub.s32 %s16, %s35
    %s37 = ssub.s32 %s17, %s31
    %s38 = sor.u32 %s36, %s37
    %p39 = scmp.eq.s32.totalorder %s38, 0
    %s41 = sadd.s32 %s40, 1
    %s42 = scalar_select %p39, %s40, %s41
    %p45 = pneg %p39
    %p46 = scmp.eq.s32.totalorder %s9, 1
    %p47 = por %p45, %p46
    %p48 = scmp.ne.s32.totalorder %s40, %s43
    %p49 = scmp.eq.s32.totalorder %s9, 0
    %p50 = por %p48, %p49
    %p51 = scmp.ne.s32.totalorder %s40, %s43
    %p52 = scmp.eq.s32.totalorder %s14, 1
    %p53 = por %p51, %p52
    %p54 = scmp.ne.s32.totalorder %s43, %s44
    %p55 = scmp.eq.s32.totalorder %s14, 0
    %p56 = por %p54, %p55
    %p57 = scmp.ne.s32.totalorder %s43, %s44
    %p58 = scmp.eq.s32.totalorder %s15, 1
    %p59 = por %p57, %p58
    %p61 = scmp.ne.s32.totalorder %s44, %s60
    %p62 = scmp.eq.s32.totalorder %s15, 0
    %p63 = por %p61, %p62
    %s64 = ssub.s32 %s16, %s35
    %s65 = ssub.s32 %s18, %s27
    %s66 = sor.u32 %s64, %s65
    %p67 = scmp.eq.s32.totalorder %s66, 0
    %s69 = sadd.s32 %s68, 1
    %s70 = scalar_select %p67, %s68, %s69
    %p73 = pneg %p67
    %p74 = scmp.eq.s32.totalorder %s9, 1
    %p75 = por %p73, %p74
    %p76 = scmp.ne.s32.totalorder %s68, %s71
    %p77 = scmp.eq.s32.totalorder %s9, 0
    %p78 = por %p76, %p77
    %p79 = scmp.ne.s32.totalorder %s68, %s71
    %p80 = scmp.eq.s32.totalorder %s14, 1
    %p81 = por %p79, %p80
    %p82 = scmp.ne.s32.totalorder %s71, %s72
    %p83 = scmp.eq.s32.totalorder %s14, 0
    %p84 = por %p82, %p83
    %p85 = scmp.ne.s32.totalorder %s71, %s72
    %p86 = scmp.eq.s32.totalorder %s15, 1
    %p87 = por %p85, %p86
    %p89 = scmp.ne.s32.totalorder %s72, %s88
    %p90 = scmp.eq.s32.totalorder %s15, 0
    %p91 = por %p89, %p90
    %s92 = ssub.s32 %s16, %s35
    %s93 = ssub.s32 %s18, %s27
    %s94 = sor.u32 %s92, %s93
    %p95 = scmp.eq.s32.totalorder %s94, 0
    %s97 = sadd.s32 %s96, 1
    %s98 = scalar_select %p95, %s96, %s97
    %p101 = pneg %p95
    %p102 = scmp.eq.s32.totalorder %s9, 1
    %p103 = por %p101, %p102
    %p104 = scmp.ne.s32.totalorder %s96, %s99
    %p105 = scmp.eq.s32.totalorder %s9, 0
    %p106 = por %p104, %p105
    %p107 = scmp.ne.s32.totalorder %s96, %s99
    %p108 = scmp.eq.s32.totalorder %s14, 1
    %p109 = por %p107, %p108
    %p110 = scmp.ne.s32.totalorder %s99, %s100
    %p111 = scmp.eq.s32.totalorder %s14, 0
    %p112 = por %p110, %p111
    %p113 = scmp.ne.s32.totalorder %s99, %s100
    %p114 = scmp.eq.s32.totalorder %s15, 1
    %p115 = por %p113, %p114
    %p117 = scmp.ne.s32.totalorder %s100, %s116
    %p118 = scmp.eq.s32.totalorder %s15, 0
    %p119 = por %p117, %p118
    %s120 = ssub.s32 %s16, %s35
    %s121 = ssub.s32 %s17, %s31
    %s122 = sor.u32 %s120, %s121
    %p123 = scmp.eq.s32.totalorder %s122, 0
    %s125 = sadd.s32 %s124, 1
    %s126 = scalar_select %p123, %s124, %s125
    %p129 = pneg %p123
    %p130 = scmp.eq.s32.totalorder %s9, 1
    %p131 = por %p129, %p130
    %p132 = scmp.ne.s32.totalorder %s124, %s127
    %p133 = scmp.eq.s32.totalorder %s9, 0
    %p134 = por %p132, %p133
    %p135 = scmp.ne.s32.totalorder %s124, %s127
    %p136 = scmp.eq.s32.totalorder %s14, 1
    %p137 = por %p135, %p136
    %p138 = scmp.ne.s32.totalorder %s127, %s128
    %p139 = scmp.eq.s32.totalorder %s14, 0
    %p140 = por %p138, %p139
    %p141 = scmp.ne.s32.totalorder %s127, %s128
    %p142 = scmp.eq.s32.totalorder %s15, 1
    %p143 = por %p141, %p142
    %p145 = scmp.ne.s32.totalorder %s128, %s144
    %p146 = scmp.eq.s32.totalorder %s15, 0
    %p147 = por %p145, %p146
    %p148 = scmp.le.s32.totalorder 1, %s9
    %p149 = scmp.lt.s32.totalorder %s9, 3
    %p150 = pnand %p148, %p149
    %p151 = pneg %p150
    // Predicated region
    $region9: #{multi_headed_attention.8} parent=5 // pred_check
      _
    $region10: #{multi_headed_attention.8} parent=5 // pred_check_branch
      %153 = sbr.rel (%p150) target = $region12
    $region11: #{multi_headed_attention.8} parent=5 // pred_region
      %s154 = ssub.s32 %s9, 1
    $region12: #{multi_headed_attention.8} parent=5 // pred_fallthru
      _
    %p155 = scmp.lt.s32.totalorder %s9, 2
    // Predicated region
    $region13: #{multi_headed_attention.8} parent=5 // pred_check
      %p156 = pneg %p155
    $region14: #{multi_headed_attention.8} parent=5 // pred_check_branch
      %158 = sbr.rel (%p156) target = $region16
    $region15: #{multi_headed_attention.8} parent=5 // pred_region
      // Predicated region
      $region17: #{multi_headed_attention.8} parent=15 // pred_check
        %p159 = pneg %p50
      $region18: #{multi_headed_attention.8} parent=15 // pred_check_branch
        %161 = sbr.rel (%p159) target = $region20
      $region19: #{multi_headed_attention.8} parent=15 // pred_region
        %p162 = scmp.lt.s32.totalorder %s16, 1
        %s163 = scalar_select %p162, %s16, 1
        %p164 = scmp.lt.s32.totalorder %s17, 0
        %s165 = scalar_select %p164, %s17, 0
        %s166 = sadd.s32 %s165, %s163
        %s167 = smul.addr %s166, 4
        %s168 = scalar_lea.vmem %s0, %s167
      $region20: #{multi_headed_attention.8} parent=15 // pred_fallthru
        _
      // Predicated region
      $region21: #{multi_headed_attention.8} parent=15 // pred_check
        %p169 = pneg %p78
      $region22: #{multi_headed_attention.8} parent=15 // pred_check_branch
        %171 = sbr.rel (%p169) target = $region24
      $region23: #{multi_headed_attention.8} parent=15 // pred_region
        %p172 = scmp.lt.s32.totalorder %s16, 1
        %s173 = scalar_select %p172, %s16, 1
        %p174 = scmp.lt.s32.totalorder %s18, 0
        %s175 = scalar_select %p174, %s18, 0
        %s176 = sadd.s32 %s175, %s173
        %s177 = smul.addr %s176, 4
        %s178 = scalar_lea.vmem %s1, %s177
      $region24: #{multi_headed_attention.8} parent=15 // pred_fallthru
        _
      // Predicated region
      $region25: #{multi_headed_attention.8} parent=15 // pred_check
        %p179 = pneg %p106
      $region26: #{multi_headed_attention.8} parent=15 // pred_check_branch
        %181 = sbr.rel (%p179) target = $region28
      $region27: #{multi_headed_attention.8} parent=15 // pred_region
        %p182 = scmp.lt.s32.totalorder %s16, 1
        %s183 = scalar_select %p182, %s16, 1
        %p184 = scmp.lt.s32.totalorder %s18, 0
        %s185 = scalar_select %p184, %s18, 0
        %s186 = sadd.s32 %s185, %s183
        %s187 = smul.addr %s186, 4
        %s188 = scalar_lea.vmem %s2, %s187
      $region28: #{multi_headed_attention.8} parent=15 // pred_fallthru
        _
    $region16: #{multi_headed_attention.8} parent=5 // pred_fallthru
      _
    %p189 = scmp.le.s32.totalorder 1, %s9
    %p190 = scmp.lt.s32.totalorder %s9, 3
    %p191 = pnand %p189, %p190
    %p192 = pneg %p191
    // Predicated region
    $region29: #{multi_headed_attention.8} parent=5 // pred_check
      _
    $region30: #{multi_headed_attention.8} parent=5 // pred_check_branch
      %194 = sbr.rel (%p191) target = $region32
    $region31: #{multi_headed_attention.8} parent=5 // pred_region
      %s195 = ssub.s32 %s9, 1
      %p196 = scmp.lt.s32.totalorder %s19, 1
      %s197 = scalar_select %p196, %s19, 1
      %p198 = scmp.lt.s32.totalorder %s20, 0
      %s199 = scalar_select %p198, %s20, 0
      %s200 = sadd.s32 %s199, %s197
      %s201 = smul.addr %s200, 4
      %s202 = scalar_lea.vmem %s0, %s201
      %p203 = pneg %p56
      %p204 = pneg %p53
      %p205 = scmp.lt.s32.totalorder %s19, 1
      %s206 = scalar_select %p205, %s19, 1
      %p207 = scmp.lt.s32.totalorder %s21, 0
      %s208 = scalar_select %p207, %s21, 0
      %s209 = sadd.s32 %s208, %s206
      %s210 = smul.addr %s209, 4
      %s211 = scalar_lea.vmem %s1, %s210
      %p212 = pneg %p84
      %p213 = pneg %p81
      %p214 = scmp.lt.s32.totalorder %s19, 1
      %s215 = scalar_select %p214, %s19, 1
      %p216 = scmp.lt.s32.totalorder %s21, 0
      %s217 = scalar_select %p216, %s21, 0
      %s218 = sadd.s32 %s217, %s215
      %s219 = smul.addr %s218, 4
      %s220 = scalar_lea.vmem %s2, %s219
      %p221 = pneg %p112
      %p222 = pneg %p109
      %p223 = pneg %p140
      %p224 = pneg %p137
      %p225 = scmp.lt.s32.totalorder %s19, 1
      %s226 = scalar_select %p225, %s19, 1
      %p227 = scmp.lt.s32.totalorder %s20, 0
      %s228 = scalar_select %p227, %s20, 0
      %s229 = sadd.s32 %s228, %s226
      %s230 = smul.addr %s229, 4
      %s231 = scalar_lea.vmem %s3, %s230
      %p232 = scmp.lt.s32.totalorder %s19, 1
      %s233 = scalar_select %p232, %s19, 1
      %p234 = scmp.lt.s32.totalorder %s20, 0
      %s235 = scalar_select %p234, %s20, 0
      %s236 = sadd.s32 %s235, %s233
      %s237 = smul.addr %s236, 4
      %s238 = scalar_lea.vmem %s0, %s237
      %p239 = scmp.lt.s32.totalorder %s19, 1
      %s240 = scalar_select %p239, %s19, 1
      %p241 = scmp.lt.s32.totalorder %s21, 0
      %s242 = scalar_select %p241, %s21, 0
      %s243 = sadd.s32 %s242, %s240
      %s244 = smul.addr %s243, 4
      %s245 = scalar_lea.vmem %s1, %s244
      %p246 = scmp.lt.s32.totalorder %s19, 1
      %s247 = scalar_select %p246, %s19, 1
      %p248 = scmp.lt.s32.totalorder %s21, 0
      %s249 = scalar_select %p248, %s21, 0
      %s250 = sadd.s32 %s249, %s247
      %s251 = smul.addr %s250, 4
      %s252 = scalar_lea.vmem %s2, %s251
      %p253 = scmp.lt.s32.totalorder %s19, 1
      %s254 = scalar_select %p253, %s19, 1
      %p255 = scmp.lt.s32.totalorder %s20, 0
      %s256 = scalar_select %p255, %s20, 0
      %s257 = sadd.s32 %s256, %s254
      %s258 = smul.addr %s257, 4
      %s259 = scalar_lea.vmem %s3, %s258
      %p261 = scmp.eq.s32.totalorder %s21, 0
      // Predicated region
      $region33: #{multi_headed_attention.8} parent=31 // pred_check
        %p262 = pneg %p261
      $region34: #{multi_headed_attention.8} parent=31 // pred_check_branch
        %264 = sbr.rel (%p262) target = $region36
      $region35: #{multi_headed_attention.8} parent=31 // pred_region
        %vm265 = vcmask 31744
        %266 = vst.msk [vmem:[#allocation2] sm:$0xff] %vm265, -inf
        %267 = vst.msk [vmem:[#allocation3] sm:$0xff] %vm265, 0.0
        %vm268 = vcmask 261120
        %269 = vst.msk [vmem:[#allocation4] sm:$0xff] %vm268, 0.0
      $region36: #{multi_headed_attention.8} parent=31 // pred_fallthru
        _
      %v270 = vld [vmem:[%s238] sm:$0xf]
      %v271 = vld [vmem:[%s245] sm:$0xf]
      %vm272 = vcmask 64512
      %v274 = vsel %vm272, %v270, 0
      %v277 = vsel %vm272, %v271, 0
      %279 = vmatprep.subr.bf16.mxu0 0
      %280 = vmatpush1.bf16.xpose.msra.mxu0 %v277
      %281 = vmatprep.subr.bf16.mxu0 0
      %282 = vmatpush1.bf16.xpose.msra.mxu0 0
      %283 = vmatprep.subr.bf16.mxu0 0
      %284 = vmatpush1.bf16.xpose.msra.mxu0 0
      %285 = vmatprep.subr.bf16.mxu0 0
      %286 = vmatpush1.bf16.xpose.msra.mxu0 0
      %287 = vmatprep.subr.bf16.mxu0 0
      %288 = vmatpush1.bf16.xpose.msra.mxu0 0
      %289 = vmatprep.subr.bf16.mxu0 0
      %290 = vmatpush1.bf16.xpose.msra.mxu0 0
      %291 = vmatprep.subr.bf16.mxu0 0
      %292 = vmatpush1.bf16.xpose.msra.mxu0 0
      %293 = vmatprep.subr.bf16.mxu0 0
      %294 = vmatpush1.bf16.xpose.msra.mxu0 0
      %295 = vmatprep.subr.bf16.mxu0 0
      %296 = vmatpush1.bf16.xpose.msra.mxu0 0
      %297 = vmatprep.subr.bf16.mxu0 0
      %298 = vmatpush1.bf16.xpose.msra.mxu0 0
      %299 = vmatprep.subr.bf16.mxu0 0
      %300 = vmatpush1.bf16.xpose.msra.mxu0 0
      %301 = vmatprep.subr.bf16.mxu0 0
      %302 = vmatpush1.bf16.xpose.msra.mxu0 0
      %303 = vmatprep.subr.bf16.mxu0 0
      %304 = vmatpush1.bf16.xpose.msra.mxu0 0
      %305 = vmatprep.subr.bf16.mxu0 0
      %306 = vmatpush1.bf16.xpose.msra.mxu0 0
      %307 = vmatprep.subr.bf16.mxu0 0
      %308 = vmatpush1.bf16.xpose.msra.mxu0 0
      %309 = vmatprep.subr.bf16.mxu0 0
      %310 = vmatpush1.bf16.xpose.msra.mxu0 0
      %311 = vmatprep.mubr.bf16.mxu0 0
      %312 = vmatmul.mubr.bf16.gmra.mrb[0].mxu0 %v274
      %v313 = vpop.f32.mrb[0].mxu0
      %v314 = vadd.f32 0.0, %v313
      %v315 = vpop.f32.mrb[0].mxu0
      %v316 = vpop.f32.mrb[0].mxu0
      %v317 = vpop.f32.mrb[0].mxu0
      %318 = vdwg.mxu0
      %v319 = vld [vmem:[#allocation2] sm:$0xff]
      %v320 = vsel %vm272, %v314, -inf
      %321 = vmax.xlane.f32.xlu0 %v320
      %v322 = vpop.xlane.xlu0 %321
      %v323 = vmax.f32 %v319, %v322
      %v324 = vsub.f32 %v319, %v323
      %v325 = vmul.f32 %v324, 1.442695
      %v326 = vpow.pop %v325
      %328 = vset.pattern.permute.xlu0 0
      %329 = vperm.xlu0 %328, %v323
      %v330 = vpop.permute.xlu0 %329
      %v332 = vsub.f32 %v314, %v330
      %v333 = vmul.f32 %v332, 1.442695
      %v334 = vpow.pop %v333
      %v335 = vld [vmem:[#allocation3] sm:$0xff]
      %v336 = vmul.f32 %v326, %v335
      %v337 = vsel %vm272, %v334, 0.0
      %338 = vadd.xlane.f32.xlu0 %v337
      %v339 = vpop.xlane.xlu0 %338
      %v340 = vadd.f32 %v336, %v339
      %vm341 = vcmask 7168
      %342 = vst.msk [vmem:[#allocation3] sm:$0xff] %vm341, %v340
      %343 = vst.msk [vmem:[#allocation2] sm:$0xff] %vm341, %v323
      %v344 = vld [vmem:[%s252] sm:$0xf]
      %v345 = vpack.c.bf16 %v334, %v334
      %v347 = vsel %vm272, %v345, 0
      %vm349 = vcmask 1043456
      %v351 = vsel %vm349, %v344, 0
      %353 = vmatprep.subr.bf16.mxu0 0
      %354 = vmatpush1.bf16.msra.mxu0 %v351
      %355 = vmatprep.subr.bf16.mxu0 0
      %356 = vmatpush1.bf16.msra.mxu0 0
      %357 = vmatprep.subr.bf16.mxu0 0
      %358 = vmatpush1.bf16.msra.mxu0 0
      %359 = vmatprep.subr.bf16.mxu0 0
      %360 = vmatpush1.bf16.msra.mxu0 0
      %361 = vmatprep.subr.bf16.mxu0 0
      %362 = vmatpush1.bf16.msra.mxu0 0
      %363 = vmatprep.subr.bf16.mxu0 0
      %364 = vmatpush1.bf16.msra.mxu0 0
      %365 = vmatprep.subr.bf16.mxu0 0
      %366 = vmatpush1.bf16.msra.mxu0 0
      %367 = vmatprep.subr.bf16.mxu0 0
      %368 = vmatpush1.bf16.msra.mxu0 0
      %369 = vmatprep.subr.bf16.mxu0 0
      %370 = vmatpush1.bf16.msra.mxu0 0
      %371 = vmatprep.subr.bf16.mxu0 0
      %372 = vmatpush1.bf16.msra.mxu0 0
      %373 = vmatprep.subr.bf16.mxu0 0
      %374 = vmatpush1.bf16.msra.mxu0 0
      %375 = vmatprep.subr.bf16.mxu0 0
      %376 = vmatpush1.bf16.msra.mxu0 0
      %377 = vmatprep.subr.bf16.mxu0 0
      %378 = vmatpush1.bf16.msra.mxu0 0
      %379 = vmatprep.subr.bf16.mxu0 0
      %380 = vmatpush1.bf16.msra.mxu0 0
      %381 = vmatprep.subr.bf16.mxu0 0
      %382 = vmatpush1.bf16.msra.mxu0 0
      %383 = vmatprep.subr.bf16.mxu0 0
      %384 = vmatpush1.bf16.msra.mxu0 0
      %385 = vmatprep.mubr.bf16.mxu0 0
      %386 = vmatmul.mubr.bf16.gmra.mrb[0].mxu0 %v347
      %v387 = vpop.f32.mrb[0].mxu0
      %v388 = vadd.f32 0.0, %v387
      %v389 = vpop.f32.mrb[0].mxu0
      %v390 = vpop.f32.mrb[0].mxu0
      %v391 = vpop.f32.mrb[0].mxu0
      %392 = vdwg.mxu0
      %v393 = vld [vmem:[#allocation4] sm:$0xff]
      %395 = vset.pattern.permute.xlu0 0
      %396 = vperm.xlu0 %395, %v326
      %v397 = vpop.permute.xlu0 %396
      %v399 = vmul.f32 %v397, %v393
      %v400 = vadd.f32 %v399, %v388
      %401 = vst.msk [vmem:[#allocation4] sm:$0xff] %vm272, %v400
      %v402 = vld [vmem:[%s238] sm:$0xf]
      %v403 = vld [vmem:[%s245] sm:$0xf]
      %v405 = vunpack.c.l.b16 %v402
      %v406 = vpack.c.b16 %v405, %v405
      %407 = vrot.lane.b32.xlu0 %v406, 120
      %v408 = vpop.permute.xlu0 %407
      %v410 = vunpack.c.l.b16 %v403
      %v411 = vpack.c.b16 %v410, %v410
      %412 = vrot.lane.b32.xlu0 %v411, 120
      %v413 = vpop.permute.xlu0 %412
      %v415 = vsel %vm272, %v408, 0
      %v418 = vsel %vm272, %v413, 0
      %420 = vmatprep.subr.bf16.mxu0 0
      %421 = vmatpush1.bf16.xpose.msra.mxu0 %v418
      %422 = vmatprep.subr.bf16.mxu0 0
      %423 = vmatpush1.bf16.xpose.msra.mxu0 0
      %424 = vmatprep.subr.bf16.mxu0 0
      %425 = vmatpush1.bf16.xpose.msra.mxu0 0
      %426 = vmatprep.subr.bf16.mxu0 0
      %427 = vmatpush1.bf16.xpose.msra.mxu0 0
      %428 = vmatprep.subr.bf16.mxu0 0
      %429 = vmatpush1.bf16.xpose.msra.mxu0 0
      %430 = vmatprep.subr.bf16.mxu0 0
      %431 = vmatpush1.bf16.xpose.msra.mxu0 0
      %432 = vmatprep.subr.bf16.mxu0 0
      %433 = vmatpush1.bf16.xpose.msra.mxu0 0
      %434 = vmatprep.subr.bf16.mxu0 0
      %435 = vmatpush1.bf16.xpose.msra.mxu0 0
      %436 = vmatprep.subr.bf16.mxu0 0
      %437 = vmatpush1.bf16.xpose.msra.mxu0 0
      %438 = vmatprep.subr.bf16.mxu0 0
      %439 = vmatpush1.bf16.xpose.msra.mxu0 0
      %440 = vmatprep.subr.bf16.mxu0 0
      %441 = vmatpush1.bf16.xpose.msra.mxu0 0
      %442 = vmatprep.subr.bf16.mxu0 0
      %443 = vmatpush1.bf16.xpose.msra.mxu0 0
      %444 = vmatprep.subr.bf16.mxu0 0
      %445 = vmatpush1.bf16.xpose.msra.mxu0 0
      %446 = vmatprep.subr.bf16.mxu0 0
      %447 = vmatpush1.bf16.xpose.msra.mxu0 0
      %448 = vmatprep.subr.bf16.mxu0 0
      %449 = vmatpush1.bf16.xpose.msra.mxu0 0
      %450 = vmatprep.subr.bf16.mxu0 0
      %451 = vmatpush1.bf16.xpose.msra.mxu0 0
      %452 = vmatprep.mubr.bf16.mxu0 0
      %453 = vmatmul.mubr.bf16.gmra.mrb[0].mxu0 %v415
      %v454 = vpop.f32.mrb[0].mxu0
      %v455 = vadd.f32 0.0, %v454
      %v456 = vpop.f32.mrb[0].mxu0
      %v457 = vpop.f32.mrb[0].mxu0
      %v458 = vpop.f32.mrb[0].mxu0
      %459 = vdwg.mxu0
      %v460 = vld [vmem:[#allocation2] sm:$0xff]
      %v461 = vsel %vm272, %v455, -inf
      %462 = vmax.xlane.f32.xlu0 %v461
      %v463 = vpop.xlane.xlu0 %462
      %v464 = vmax.f32 %v460, %v463
      %v465 = vsub.f32 %v460, %v464
      %v466 = vmul.f32 %v465, 1.442695
      %v467 = vpow.pop %v466
      %469 = vset.pattern.permute.xlu0 1
      %470 = vperm.xlu0 %469, %v464
      %v471 = vpop.permute.xlu0 %470
      %v473 = vsub.f32 %v455, %v471
      %v474 = vmul.f32 %v473, 1.442695
      %v475 = vpow.pop %v474
      %v476 = vld [vmem:[#allocation3] sm:$0xff]
      %v477 = vmul.f32 %v467, %v476
      %v478 = vsel %vm272, %v475, 0.0
      %479 = vadd.xlane.f32.xlu0 %v478
      %v480 = vpop.xlane.xlu0 %479
      %v481 = vadd.f32 %v477, %v480
      %vm482 = vcmask 15368
      %483 = vst.msk [vmem:[#allocation3] sm:$0xff] %vm482, %v481
      %484 = vst.msk [vmem:[#allocation2] sm:$0xff] %vm482, %v464
      %v485 = vld [vmem:[%s252] sm:$0xf]
      %v486 = vpack.c.bf16 %v475, %v475
      %v488 = vunpack.c.l.b16 %v485
      %v489 = vpack.c.b16 %v488, %v488
      %490 = vrot.lane.b32.xlu0 %v489, 120
      %v491 = vpop.permute.xlu0 %490
      %v493 = vsel %vm272, %v486, 0
      %v496 = vsel %vm349, %v491, 0
      %498 = vmatprep.subr.bf16.mxu0 0
      %499 = vmatpush1.bf16.msra.mxu0 %v496
      %500 = vmatprep.subr.bf16.mxu0 0
      %501 = vmatpush1.bf16.msra.mxu0 0
      %502 = vmatprep.subr.bf16.mxu0 0
      %503 = vmatpush1.bf16.msra.mxu0 0
      %504 = vmatprep.subr.bf16.mxu0 0
      %505 = vmatpush1.bf16.msra.mxu0 0
      %506 = vmatprep.subr.bf16.mxu0 0
      %507 = vmatpush1.bf16.msra.mxu0 0
      %508 = vmatprep.subr.bf16.mxu0 0
      %509 = vmatpush1.bf16.msra.mxu0 0
      %510 = vmatprep.subr.bf16.mxu0 0
      %511 = vmatpush1.bf16.msra.mxu0 0
      %512 = vmatprep.subr.bf16.mxu0 0
      %513 = vmatpush1.bf16.msra.mxu0 0
      %514 = vmatprep.subr.bf16.mxu0 0
      %515 = vmatpush1.bf16.msra.mxu0 0
      %516 = vmatprep.subr.bf16.mxu0 0
      %517 = vmatpush1.bf16.msra.mxu0 0
      %518 = vmatprep.subr.bf16.mxu0 0
      %519 = vmatpush1.bf16.msra.mxu0 0
      %520 = vmatprep.subr.bf16.mxu0 0
      %521 = vmatpush1.bf16.msra.mxu0 0
      %522 = vmatprep.subr.bf16.mxu0 0
      %523 = vmatpush1.bf16.msra.mxu0 0
      %524 = vmatprep.subr.bf16.mxu0 0
      %525 = vmatpush1.bf16.msra.mxu0 0
      %526 = vmatprep.subr.bf16.mxu0 0
      %527 = vmatpush1.bf16.msra.mxu0 0
      %528 = vmatprep.subr.bf16.mxu0 0
      %529 = vmatpush1.bf16.msra.mxu0 0
      %530 = vmatprep.mubr.bf16.mxu0 0
      %531 = vmatmul.mubr.bf16.gmra.mrb[0].mxu0 %v493
      %v532 = vpop.f32.mrb[0].mxu0
      %v533 = vadd.f32 0.0, %v532
      %v534 = vpop.f32.mrb[0].mxu0
      %v535 = vpop.f32.mrb[0].mxu0
      %v536 = vpop.f32.mrb[0].mxu0
      %537 = vdwg.mxu0
      %v538 = vld [vmem:[#allocation4] sm:$0xff]
      %540 = vset.pattern.permute.xlu0 1
      %541 = vperm.xlu0 %540, %v467
      %v542 = vpop.permute.xlu0 %541
      %v544 = vmul.f32 %v542, %v538
      %546 = vrot.lane.b32.xlu0 %v533, 8
      %v547 = vpop.permute.xlu0 %546
      %v549 = vadd.f32 %v544, %v547
      %vm550 = vcmask 130112
      %551 = vst.msk [vmem:[#allocation4] sm:$0xff] %vm550, %v549
      %v552 = vld [vmem:[%s238] sm:$0xf]
      %v553 = vld [vmem:[%s245] sm:$0xf]
      %v555 = vunpack.c.l.b16 %v552
      %v556 = vpack.c.b16 %v555, %v555
      %557 = vrot.lane.b32.xlu0 %v556, 112
      %v558 = vpop.permute.xlu0 %557
      %v560 = vunpack.c.l.b16 %v553
      %v561 = vpack.c.b16 %v560, %v560
      %562 = vrot.lane.b32.xlu0 %v561, 112
      %v563 = vpop.permute.xlu0 %562
      %v565 = vsel %vm272, %v558, 0
      %v568 = vsel %vm272, %v563, 0
      %570 = vmatprep.subr.bf16.mxu0 0
      %571 = vmatpush1.bf16.xpose.msra.mxu0 %v568
      %572 = vmatprep.subr.bf16.mxu0 0
      %573 = vmatpush1.bf16.xpose.msra.mxu0 0
      %574 = vmatprep.subr.bf16.mxu0 0
      %575 = vmatpush1.bf16.xpose.msra.mxu0 0
      %576 = vmatprep.subr.bf16.mxu0 0
      %577 = vmatpush1.bf16.xpose.msra.mxu0 0
      %578 = vmatprep.subr.bf16.mxu0 0
      %579 = vmatpush1.bf16.xpose.msra.mxu0 0
      %580 = vmatprep.subr.bf16.mxu0 0
      %581 = vmatpush1.bf16.xpose.msra.mxu0 0
      %582 = vmatprep.subr.bf16.mxu0 0
      %583 = vmatpush1.bf16.xpose.msra.mxu0 0
      %584 = vmatprep.subr.bf16.mxu0 0
      %585 = vmatpush1.bf16.xpose.msra.mxu0 0
      %586 = vmatprep.subr.bf16.mxu0 0
      %587 = vmatpush1.bf16.xpose.msra.mxu0 0
      %588 = vmatprep.subr.bf16.mxu0 0
      %589 = vmatpush1.bf16.xpose.msra.mxu0 0
      %590 = vmatprep.subr.bf16.mxu0 0
      %591 = vmatpush1.bf16.xpose.msra.mxu0 0
      %592 = vmatprep.subr.bf16.mxu0 0
      %593 = vmatpush1.bf16.xpose.msra.mxu0 0
      %594 = vmatprep.subr.bf16.mxu0 0
      %595 = vmatpush1.bf16.xpose.msra.mxu0 0
      %596 = vmatprep.subr.bf16.mxu0 0
      %597 = vmatpush1.bf16.xpose.msra.mxu0 0
      %598 = vmatprep.subr.bf16.mxu0 0
      %599 = vmatpush1.bf16.xpose.msra.mxu0 0
      %600 = vmatprep.subr.bf16.mxu0 0
      %601 = vmatpush1.bf16.xpose.msra.mxu0 0
      %602 = vmatprep.mubr.bf16.mxu0 0
      %603 = vmatmul.mubr.bf16.gmra.mrb[0].mxu0 %v565
      %v604 = vpop.f32.mrb[0].mxu0
      %v605 = vadd.f32 0.0, %v604
      %v606 = vpop.f32.mrb[0].mxu0
      %v607 = vpop.f32.mrb[0].mxu0
      %v608 = vpop.f32.mrb[0].mxu0
      %609 = vdwg.mxu0
      %v610 = vld [vmem:[#allocation2] sm:$0xff]
      %v611 = vsel %vm272, %v605, -inf
      %612 = vmax.xlane.f32.xlu0 %v611
      %v613 = vpop.xlane.xlu0 %612
      %v614 = vmax.f32 %v610, %v613
      %v615 = vsub.f32 %v610, %v614
      %v616 = vmul.f32 %v615, 1.442695
      %v617 = vpow.pop %v616
      %619 = vset.pattern.permute.xlu0 2
      %620 = vperm.xlu0 %619, %v614
      %v621 = vpop.permute.xlu0 %620
      %v623 = vsub.f32 %v605, %v621
      %v624 = vmul.f32 %v623, 1.442695
      %v625 = vpow.pop %v624
      %v626 = vld [vmem:[#allocation3] sm:$0xff]
      %v627 = vmul.f32 %v617, %v626
      %v628 = vsel %vm272, %v625, 0.0
      %629 = vadd.xlane.f32.xlu0 %v628
      %v630 = vpop.xlane.xlu0 %629
      %v631 = vadd.f32 %v627, %v630
      %vm632 = vcmask 23568
      %633 = vst.msk [vmem:[#allocation3] sm:$0xff] %vm632, %v631
      %634 = vst.msk [vmem:[#allocation2] sm:$0xff] %vm632, %v614
      %v635 = vld [vmem:[%s252] sm:$0xf]
      %v636 = vpack.c.bf16 %v625, %v625
      %v638 = vunpack.c.l.b16 %v635
      %v639 = vpack.c.b16 %v638, %v638
      %640 = vrot.lane.b32.xlu0 %v639, 112
      %v641 = vpop.permute.xlu0 %640
      %v643 = vsel %vm272, %v636, 0
      %v646 = vsel %vm349, %v641, 0
      %648 = vmatprep.subr.bf16.mxu0 0
      %649 = vmatpush1.bf16.msra.mxu0 %v646
      %650 = vmatprep.subr.bf16.mxu0 0
      %651 = vmatpush1.bf16.msra.mxu0 0
      %652 = vmatprep.subr.bf16.mxu0 0
      %653 = vmatpush1.bf16.msra.mxu0 0
      %654 = vmatprep.subr.bf16.mxu0 0
      %655 = vmatpush1.bf16.msra.mxu0 0
      %656 = vmatprep.subr.bf16.mxu0 0
      %657 = vmatpush1.bf16.msra.mxu0 0
      %658 = vmatprep.subr.bf16.mxu0 0
      %659 = vmatpush1.bf16.msra.mxu0 0
      %660 = vmatprep.subr.bf16.mxu0 0
      %661 = vmatpush1.bf16.msra.mxu0 0
      %662 = vmatprep.subr.bf16.mxu0 0
      %663 = vmatpush1.bf16.msra.mxu0 0
      %664 = vmatprep.subr.bf16.mxu0 0
      %665 = vmatpush1.bf16.msra.mxu0 0
      %666 = vmatprep.subr.bf16.mxu0 0
      %667 = vmatpush1.bf16.msra.mxu0 0
      %668 = vmatprep.subr.bf16.mxu0 0
      %669 = vmatpush1.bf16.msra.mxu0 0
      %670 = vmatprep.subr.bf16.mxu0 0
      %671 = vmatpush1.bf16.msra.mxu0 0
      %672 = vmatprep.subr.bf16.mxu0 0
      %673 = vmatpush1.bf16.msra.mxu0 0
      %674 = vmatprep.subr.bf16.mxu0 0
      %675 = vmatpush1.bf16.msra.mxu0 0
      %676 = vmatprep.subr.bf16.mxu0 0
      %677 = vmatpush1.bf16.msra.mxu0 0
      %678 = vmatprep.subr.bf16.mxu0 0
      %679 = vmatpush1.bf16.msra.mxu0 0
      %680 = vmatprep.mubr.bf16.mxu0 0
      %681 = vmatmul.mubr.bf16.gmra.mrb[0].mxu0 %v643
      %v682 = vpop.f32.mrb[0].mxu0
      %v683 = vadd.f32 0.0, %v682
      %v684 = vpop.f32.mrb[0].mxu0
      %v685 = vpop.f32.mrb[0].mxu0
      %v686 = vpop.f32.mrb[0].mxu0
      %687 = vdwg.mxu0
      %v688 = vld [vmem:[#allocation4] sm:$0xff]
      %690 = vset.pattern.permute.xlu0 2
      %691 = vperm.xlu0 %690, %v617
      %v692 = vpop.permute.xlu0 %691
      %v694 = vmul.f32 %v692, %v688
      %696 = vrot.lane.b32.xlu0 %v683, 16
      %v697 = vpop.permute.xlu0 %696
      %v699 = vadd.f32 %v694, %v697
      %vm700 = vcmask 195712
      %701 = vst.msk [vmem:[#allocation4] sm:$0xff] %vm700, %v699
      %v702 = vld [vmem:[%s238] sm:$0xf]
      %v703 = vld [vmem:[%s245] sm:$0xf]
      %v705 = vunpack.c.l.b16 %v702
      %v706 = vpack.c.b16 %v705, %v705
      %707 = vrot.lane.b32.xlu0 %v706, 104
      %v708 = vpop.permute.xlu0 %707
      %v710 = vunpack.c.l.b16 %v703
      %v711 = vpack.c.b16 %v710, %v710
      %712 = vrot.lane.b32.xlu0 %v711, 104
      %v713 = vpop.permute.xlu0 %712
      %v715 = vsel %vm272, %v708, 0
      %v718 = vsel %vm272, %v713, 0
      %720 = vmatprep.subr.bf16.mxu0 0
      %721 = vmatpush1.bf16.xpose.msra.mxu0 %v718
      %722 = vmatprep.subr.bf16.mxu0 0
      %723 = vmatpush1.bf16.xpose.msra.mxu0 0
      %724 = vmatprep.subr.bf16.mxu0 0
      %725 = vmatpush1.bf16.xpose.msra.mxu0 0
      %726 = vmatprep.subr.bf16.mxu0 0
      %727 = vmatpush1.bf16.xpose.msra.mxu0 0
      %728 = vmatprep.subr.bf16.mxu0 0
      %729 = vmatpush1.bf16.xpose.msra.mxu0 0
      %730 = vmatprep.subr.bf16.mxu0 0
      %731 = vmatpush1.bf16.xpose.msra.mxu0 0
      %732 = vmatprep.subr.bf16.mxu0 0
      %733 = vmatpush1.bf16.xpose.msra.mxu0 0
      %734 = vmatprep.subr.bf16.mxu0 0
      %735 = vmatpush1.bf16.xpose.msra.mxu0 0
      %736 = vmatprep.subr.bf16.mxu0 0
      %737 = vmatpush1.bf16.xpose.msra.mxu0 0
      %738 = vmatprep.subr.bf16.mxu0 0
      %739 = vmatpush1.bf16.xpose.msra.mxu0 0
      %740 = vmatprep.subr.bf16.mxu0 0
      %741 = vmatpush1.bf16.xpose.msra.mxu0 0
      %742 = vmatprep.subr.bf16.mxu0 0
      %743 = vmatpush1.bf16.xpose.msra.mxu0 0
      %744 = vmatprep.subr.bf16.mxu0 0
      %745 = vmatpush1.bf16.xpose.msra.mxu0 0
      %746 = vmatprep.subr.bf16.mxu0 0
      %747 = vmatpush1.bf16.xpose.msra.mxu0 0
      %748 = vmatprep.subr.bf16.mxu0 0
      %749 = vmatpush1.bf16.xpose.msra.mxu0 0
      %750 = vmatprep.subr.bf16.mxu0 0
      %751 = vmatpush1.bf16.xpose.msra.mxu0 0
      %752 = vmatprep.mubr.bf16.mxu0 0
      %753 = vmatmul.mubr.bf16.gmra.mrb[0].mxu0 %v715
      %v754 = vpop.f32.mrb[0].mxu0
      %v755 = vadd.f32 0.0, %v754
      %v756 = vpop.f32.mrb[0].mxu0
      %v757 = vpop.f32.mrb[0].mxu0
      %v758 = vpop.f32.mrb[0].mxu0
      %759 = vdwg.mxu0
      %v760 = vld [vmem:[#allocation2] sm:$0xff]
      %v761 = vsel %vm272, %v755, -inf
      %762 = vmax.xlane.f32.xlu0 %v761
      %v763 = vpop.xlane.xlu0 %762
      %v764 = vmax.f32 %v760, %v763
      %v765 = vsub.f32 %v760, %v764
      %v766 = vmul.f32 %v765, 1.442695
      %v767 = vpow.pop %v766
      %769 = vset.pattern.permute.xlu0 3
      %770 = vperm.xlu0 %769, %v764
      %v771 = vpop.permute.xlu0 %770
      %v773 = vsub.f32 %v755, %v771
      %v774 = vmul.f32 %v773, 1.442695
      %v775 = vpow.pop %v774
      %v776 = vld [vmem:[#allocation3] sm:$0xff]
      %v777 = vmul.f32 %v767, %v776
      %v778 = vsel %vm272, %v775, 0.0
      %779 = vadd.xlane.f32.xlu0 %v778
      %v780 = vpop.xlane.xlu0 %779
      %v781 = vadd.f32 %v777, %v780
      %vm782 = vcmask 31768
      %783 = vst.msk [vmem:[#allocation3] sm:$0xff] %vm782, %v781
      %784 = vst.msk [vmem:[#allocation2] sm:$0xff] %vm782, %v764
      %v785 = vld [vmem:[%s252] sm:$0xf]
      %v786 = vpack.c.bf16 %v775, %v775
      %v788 = vunpack.c.l.b16 %v785
      %v789 = vpack.c.b16 %v788, %v788
      %790 = vrot.lane.b32.xlu0 %v789, 104
      %v791 = vpop.permute.xlu0 %790
      %v793 = vsel %vm272, %v786, 0
      %v796 = vsel %vm349, %v791, 0
      %798 = vmatprep.subr.bf16.mxu0 0
      %799 = vmatpush1.bf16.msra.mxu0 %v796
      %800 = vmatprep.subr.bf16.mxu0 0
      %801 = vmatpush1.bf16.msra.mxu0 0
      %802 = vmatprep.subr.bf16.mxu0 0
      %803 = vmatpush1.bf16.msra.mxu0 0
      %804 = vmatprep.subr.bf16.mxu0 0
      %805 = vmatpush1.bf16.msra.mxu0 0
      %806 = vmatprep.subr.bf16.mxu0 0
      %807 = vmatpush1.bf16.msra.mxu0 0
      %808 = vmatprep.subr.bf16.mxu0 0
      %809 = vmatpush1.bf16.msra.mxu0 0
      %810 = vmatprep.subr.bf16.mxu0 0
      %811 = vmatpush1.bf16.msra.mxu0 0
      %812 = vmatprep.subr.bf16.mxu0 0
      %813 = vmatpush1.bf16.msra.mxu0 0
      %814 = vmatprep.subr.bf16.mxu0 0
      %815 = vmatpush1.bf16.msra.mxu0 0
      %816 = vmatprep.subr.bf16.mxu0 0
      %817 = vmatpush1.bf16.msra.mxu0 0
      %818 = vmatprep.subr.bf16.mxu0 0
      %819 = vmatpush1.bf16.msra.mxu0 0
      %820 = vmatprep.subr.bf16.mxu0 0
      %821 = vmatpush1.bf16.msra.mxu0 0
      %822 = vmatprep.subr.bf16.mxu0 0
      %823 = vmatpush1.bf16.msra.mxu0 0
      %824 = vmatprep.subr.bf16.mxu0 0
      %825 = vmatpush1.bf16.msra.mxu0 0
      %826 = vmatprep.subr.bf16.mxu0 0
      %827 = vmatpush1.bf16.msra.mxu0 0
      %828 = vmatprep.subr.bf16.mxu0 0
      %829 = vmatpush1.bf16.msra.mxu0 0
      %830 = vmatprep.mubr.bf16.mxu0 0
      %831 = vmatmul.mubr.bf16.gmra.mrb[0].mxu0 %v793
      %v832 = vpop.f32.mrb[0].mxu0
      %v833 = vadd.f32 0.0, %v832
      %v834 = vpop.f32.mrb[0].mxu0
      %v835 = vpop.f32.mrb[0].mxu0
      %v836 = vpop.f32.mrb[0].mxu0
      %837 = vdwg.mxu0
      %v838 = vld [vmem:[#allocation4] sm:$0xff]
      %840 = vset.pattern.permute.xlu0 3
      %841 = vperm.xlu0 %840, %v767
      %v842 = vpop.permute.xlu0 %841
      %v844 = vmul.f32 %v842, %v838
      %846 = vrot.lane.b32.xlu0 %v833, 24
      %v847 = vpop.permute.xlu0 %846
      %v849 = vadd.f32 %v844, %v847
      %vm850 = vcmask 261312
      %851 = vst.msk [vmem:[#allocation4] sm:$0xff] %vm850, %v849
      // Predicated region
      $region37: #{multi_headed_attention.8} parent=31 // pred_check
        %p852 = pneg %p261
      $region38: #{multi_headed_attention.8} parent=31 // pred_check_branch
        %854 = sbr.rel (%p852) target = $region40
      $region39: #{multi_headed_attention.8} parent=31 // pred_region
        %v855 = vld [vmem:[#allocation3] sm:$0xff]
        %v856 = vrcp.pop %v855
        %v857 = vld [vmem:[#allocation4] sm:$0xff]
        %859 = vset.pattern.permute.xlu0 0
        %860 = vperm.xlu0 %859, %v856
        %v861 = vpop.permute.xlu0 %860
        %v863 = vmul.f32 %v857, %v861
        %864 = vst.msk [vmem:[#allocation4] sm:$0xff] %vm272, %v863
        %v865 = vld [vmem:[#allocation3] sm:$0xff]
        %v866 = vrcp.pop %v865
        %v867 = vld [vmem:[#allocation4] sm:$0xff]
        %869 = vset.pattern.permute.xlu0 1
        %870 = vperm.xlu0 %869, %v866
        %v871 = vpop.permute.xlu0 %870
        %v873 = vmul.f32 %v867, %v871
        %874 = vst.msk [vmem:[#allocation4] sm:$0xff] %vm550, %v873
        %v875 = vld [vmem:[#allocation3] sm:$0xff]
        %v876 = vrcp.pop %v875
        %v877 = vld [vmem:[#allocation4] sm:$0xff]
        %879 = vset.pattern.permute.xlu0 2
        %880 = vperm.xlu0 %879, %v876
        %v881 = vpop.permute.xlu0 %880
        %v883 = vmul.f32 %v877, %v881
        %884 = vst.msk [vmem:[#allocation4] sm:$0xff] %vm700, %v883
        %v885 = vld [vmem:[#allocation3] sm:$0xff]
        %v886 = vrcp.pop %v885
        %v887 = vld [vmem:[#allocation4] sm:$0xff]
        %889 = vset.pattern.permute.xlu0 3
        %890 = vperm.xlu0 %889, %v886
        %v891 = vpop.permute.xlu0 %890
        %v893 = vmul.f32 %v887, %v891
        %894 = vst.msk [vmem:[#allocation4] sm:$0xff] %vm850, %v893
        %v895 = vld [vmem:[#allocation4] sm:$0xff]
        %v896 = vpack.c.bf16 %v895, %v895
        %vm897 = vcmask 257024
        %898 = vst.msk [vmem:[%s259] sm:$0xf] %vm897, %v896
      $region40: #{multi_headed_attention.8} parent=31 // pred_fallthru
        _
      %p899 = scmp.lt.s32.totalorder %s19, 1
      %s900 = scalar_select %p899, %s19, 1
      %p901 = scmp.lt.s32.totalorder %s20, 0
      %s902 = scalar_select %p901, %s20, 0
      %s903 = sadd.s32 %s902, %s900
      %s904 = smul.addr %s903, 4
      %s905 = scalar_lea.vmem %s3, %s904
      // Predicated region
      $region41: #{multi_headed_attention.8} parent=31 // pred_check
        %p906 = pneg %p137
      $region42: #{multi_headed_attention.8} parent=31 // pred_check_branch
        %908 = sbr.rel (%p906) target = $region44
      $region43: #{multi_headed_attention.8} parent=31 // pred_region
        _
      $region44: #{multi_headed_attention.8} parent=31 // pred_fallthru
        _
    $region32: #{multi_headed_attention.8} parent=5 // pred_fallthru
      _
    %p909 = scmp.le.s32.totalorder 2, %s9
    // Predicated region
    $region45: #{multi_headed_attention.8} parent=5 // pred_check
      %p910 = pneg %p909
    $region46: #{multi_headed_attention.8} parent=5 // pred_check_branch
      %912 = sbr.rel (%p910) target = $region48
    $region47: #{multi_headed_attention.8} parent=5 // pred_region
      %s913 = ssub.s32 %s9, 2
      // Predicated region
      $region49: #{multi_headed_attention.8} parent=47 // pred_check
        %p914 = pneg %p143
      $region50: #{multi_headed_attention.8} parent=47 // pred_check_branch
        %916 = sbr.rel (%p914) target = $region52
      $region51: #{multi_headed_attention.8} parent=47 // pred_region
        %p917 = scmp.lt.s32.totalorder %s22, 1
        %s918 = scalar_select %p917, %s22, 1
        %p919 = scmp.lt.s32.totalorder %s23, 0
        %s920 = scalar_select %p919, %s23, 0
        %s921 = sadd.s32 %s920, %s918
        %s922 = smul.addr %s921, 4
        %s923 = scalar_lea.vmem %s3, %s922
      $region52: #{multi_headed_attention.8} parent=47 // pred_fallthru
        _
    $region48: #{multi_headed_attention.8} parent=5 // pred_fallthru
      _
  $region6: #{multi_headed_attention.8} parent=0 // loop_footer
    %s13 = sadd.s32 1, %s9
  $region7: #{multi_headed_attention.8} parent=0 // loop_footer_branch
    %8 = sbr.rel target = $region3
  $region8: #{multi_headed_attention.8} parent=0 // loop_exit
    _

// kernel: multi_headed_attention.9
$region0: #{multi_headed_attention.9}
  #allocation0 [shape = 'u32[]', space=smem, size = 0x4, offset = 0x4, fixed_abs, tag = 'smem constant byte address 0x4 - core index']
  #allocation1 [shape = 'u32[144,128]{1,0:T(1,128)}', space=vmem, size = 0x12000, scoped, tag = 'internal scratch']
  #allocation2 [shape = 'f32[16,128]{1,0:T(8,128)}', space=vmem, size = 0x2000, scoped, tag = 'scratch operand']
  %s0 = inlined_call_operand.vmem [shape: bf16[16,128], index: 0, kind: input, shape index: {}]
  %s1 = inlined_call_operand.vmem [shape: bf16[1,128,128], index: 1, kind: input, shape index: {}]
  %s2 = inlined_call_operand.vmem [shape: f32[1,1,128], index: 2, kind: input, shape index: {}]
  %s3 = inlined_call_operand.vmem [shape: f32[1,16,128], index: 3, kind: output, shape index: {}]
  %s4 = sld [smem:[#allocation0]]
  $region30: #{multi_headed_attention.9} parent=0
    _
  %s6 = ssub.s32 1, %s4
  %s7 = scalar_select 0, %s6, %s4
  // Predicated region
  $region2: #{multi_headed_attention.9} parent=0 // pred_check
    _
  $region3: #{multi_headed_attention.9} parent=0 // pred_check_branch
    %9 = sbr.rel (0) target = $region5
  $region4: #{multi_headed_attention.9} parent=0 // pred_region
    _
  $region5: #{multi_headed_attention.9} parent=0 // pred_fallthru
    _
  // Predicated region
  $region6: #{multi_headed_attention.9} parent=0 // pred_check
    _
  $region7: #{multi_headed_attention.9} parent=0 // pred_check_branch
    %11 = sbr.rel (0) target = $region9
  $region8: #{multi_headed_attention.9} parent=0 // pred_region
    _
  $region9: #{multi_headed_attention.9} parent=0 // pred_fallthru
    _
  // Predicated region
  $region10: #{multi_headed_attention.9} parent=0 // pred_check
    _
  $region11: #{multi_headed_attention.9} parent=0 // pred_check_branch
    %13 = sbr.rel (0) target = $region13
  $region12: #{multi_headed_attention.9} parent=0 // pred_region
    _
  $region13: #{multi_headed_attention.9} parent=0 // pred_fallthru
    _
  %p15 = scmp.eq.s32.totalorder 0, 0
  // Predicated region
  $region14: #{multi_headed_attention.9} parent=0 // pred_check
    %p16 = pneg %p15
  $region15: #{multi_headed_attention.9} parent=0 // pred_check_branch
    %18 = sbr.rel (%p16) target = $region17
  $region16: #{multi_headed_attention.9} parent=0 // pred_region
    %19 = vst [vmem:[#allocation2] sm:$0xff] 0.0
    %20 = vst [vmem:[#allocation2 + $0x8] sm:$0xff] 0.0
  $region17: #{multi_headed_attention.9} parent=0 // pred_fallthru
    _
  %v21 = vld [vmem:[%s0] sm:$0xf]
  %v22 = vld [vmem:[%s0 + $0x4] sm:$0xf]
  %v23 = vld [vmem:[%s1] sm:$0xf]
  %v24 = vld [vmem:[%s1 + $0x4] sm:$0xf]
  %v25 = vld [vmem:[%s1 + $0x8] sm:$0xf]
  %v26 = vld [vmem:[%s1 + $0xc] sm:$0xf]
  %v27 = vld [vmem:[%s1 + $0x10] sm:$0xf]
  %v28 = vld [vmem:[%s1 + $0x14] sm:$0xf]
  %v29 = vld [vmem:[%s1 + $0x18] sm:$0xf]
  %v30 = vld [vmem:[%s1 + $0x1c] sm:$0xf]
  %v31 = vld [vmem:[%s1 + $0x20] sm:$0xf]
  %v32 = vld [vmem:[%s1 + $0x24] sm:$0xf]
  %v33 = vld [vmem:[%s1 + $0x28] sm:$0xf]
  %v34 = vld [vmem:[%s1 + $0x2c] sm:$0xf]
  %v35 = vld [vmem:[%s1 + $0x30] sm:$0xf]
  %v36 = vld [vmem:[%s1 + $0x34] sm:$0xf]
  %v37 = vld [vmem:[%s1 + $0x38] sm:$0xf]
  %v38 = vld [vmem:[%s1 + $0x3c] sm:$0xf]
  %v39 = vld [vmem:[#allocation2] sm:$0xff]
  %v40 = vld [vmem:[#allocation2 + $0x8] sm:$0xff]
  %v43 = vunpack.c.l.b16 %v21
  %v44 = vunpack.c.l.b16 %v22
  %v45 = vpack.c.b16 %v44, %v43
  %v63 = vunpack.c.l.b16 %v23
  %v64 = vunpack.c.l.b16 %v24
  %v65 = vunpack.c.l.b16 %v25
  %v66 = vunpack.c.l.b16 %v26
  %v67 = vunpack.c.l.b16 %v27
  %v68 = vunpack.c.l.b16 %v28
  %v69 = vunpack.c.l.b16 %v29
  %v70 = vunpack.c.l.b16 %v30
  %v71 = vunpack.c.l.b16 %v31
  %v72 = vunpack.c.l.b16 %v32
  %v73 = vunpack.c.l.b16 %v33
  %v74 = vunpack.c.l.b16 %v34
  %v75 = vunpack.c.l.b16 %v35
  %v76 = vunpack.c.l.b16 %v36
  %v77 = vunpack.c.l.b16 %v37
  %v78 = vunpack.c.l.b16 %v38
  %v79 = vpack.c.b16 %v64, %v63
  %v80 = vpack.c.b16 %v66, %v65
  %v81 = vpack.c.b16 %v68, %v67
  %v82 = vpack.c.b16 %v70, %v69
  %v83 = vpack.c.b16 %v72, %v71
  %v84 = vpack.c.b16 %v74, %v73
  %v85 = vpack.c.b16 %v76, %v75
  %v86 = vpack.c.b16 %v78, %v77
  %95 = vmatprep.subr.bf16.mxu0 0
  %96 = vmatpush1.bf16.msra.mxu0 %v79
  %97 = vmatprep.subr.bf16.mxu0 0
  %98 = vmatpush1.bf16.msra.mxu0 %v80
  %99 = vmatprep.subr.bf16.mxu0 0
  %100 = vmatpush1.bf16.msra.mxu0 %v81
  %101 = vmatprep.subr.bf16.mxu0 0
  %102 = vmatpush1.bf16.msra.mxu0 %v82
  %103 = vmatprep.subr.bf16.mxu0 0
  %104 = vmatpush1.bf16.msra.mxu0 %v83
  %105 = vmatprep.subr.bf16.mxu0 0
  %106 = vmatpush1.bf16.msra.mxu0 %v84
  %107 = vmatprep.subr.bf16.mxu0 0
  %108 = vmatpush1.bf16.msra.mxu0 %v85
  %109 = vmatprep.subr.bf16.mxu0 0
  %110 = vmatpush1.bf16.msra.mxu0 %v86
  %111 = vmatprep.subr.bf16.mxu0 0
  %112 = vmatpush1.bf16.msra.mxu0 0
  %113 = vmatprep.subr.bf16.mxu0 0
  %114 = vmatpush1.bf16.msra.mxu0 0
  %115 = vmatprep.subr.bf16.mxu0 0
  %116 = vmatpush1.bf16.msra.mxu0 0
  %117 = vmatprep.subr.bf16.mxu0 0
  %118 = vmatpush1.bf16.msra.mxu0 0
  %119 = vmatprep.subr.bf16.mxu0 0
  %120 = vmatpush1.bf16.msra.mxu0 0
  %121 = vmatprep.subr.bf16.mxu0 0
  %122 = vmatpush1.bf16.msra.mxu0 0
  %123 = vmatprep.subr.bf16.mxu0 0
  %124 = vmatpush1.bf16.msra.mxu0 0
  %125 = vmatprep.subr.bf16.mxu0 0
  %126 = vmatpush1.bf16.msra.mxu0 0
  %127 = vmatprep.mubr.bf16.mxu0 0
  %128 = vmatmul.mubr.bf16.gmra.mrb[0].mxu0 %v45
  %v129 = vpop.f32.mrb[0].mxu0
  %v130 = vadd.f32 0.0, %v129
  %v131 = vpop.f32.mrb[0].mxu0
  %v132 = vpop.f32.mrb[0].mxu0
  %v133 = vadd.f32 0.0, %v132
  %v134 = vpop.f32.mrb[0].mxu0
  %135 = vdwg.mxu0
  %v136 = vadd.f32 %v39, %v130
  %v137 = vadd.f32 %v40, %v133
  %138 = vst [vmem:[#allocation2] sm:$0xff] %v136
  %139 = vst [vmem:[#allocation2 + $0x8] sm:$0xff] %v137
  // Predicated region
  $region18: #{multi_headed_attention.9} parent=0 // pred_check
    %p140 = pneg %p15
  $region19: #{multi_headed_attention.9} parent=0 // pred_check_branch
    %142 = sbr.rel (%p140) target = $region21
  $region20: #{multi_headed_attention.9} parent=0 // pred_region
    %v143 = vld [vmem:[#allocation2] sm:$0xff]
    %v144 = vld [vmem:[#allocation2 + $0x8] sm:$0xff]
    %v145 = vld [vmem:[%s2] sm:$0x1]
    %v147 = vlaneseq
    %v148 = vshrl.u32 %v147, 7
    %v149 = vsub.s32 0, %v148
    %v150 = vrot.slane %v145, %v149
    %v152 = vadd.f32 %v143, %v150
    %v153 = vadd.f32 %v144, %v150
    %154 = vst [vmem:[%s3] sm:$0xff] %v152
    %155 = vst [vmem:[%s3 + $0x8] sm:$0xff] %v153
  $region21: #{multi_headed_attention.9} parent=0 // pred_fallthru
    _
  // Predicated region
  $region22: #{multi_headed_attention.9} parent=0 // pred_check
    _
  $region23: #{multi_headed_attention.9} parent=0 // pred_check_branch
    %157 = sbr.rel (0) target = $region25
  $region24: #{multi_headed_attention.9} parent=0 // pred_region
    _
  $region25: #{multi_headed_attention.9} parent=0 // pred_fallthru
    _
  // Predicated region
  $region26: #{multi_headed_attention.9} parent=0 // pred_check
    _
  $region27: #{multi_headed_attention.9} parent=0 // pred_check_branch
    %159 = sbr.rel (0) target = $region29
  $region28: #{multi_headed_attention.9} parent=0 // pred_region
    _
  $region29: #{multi_headed_attention.9} parent=0 // pred_fallthru
    _

</llo_original>
